<compile_context>
chip_gen: v5e
topology: v5e:2x2
jax: 0.10.0
libtpu: 0.0.40
codegen_flags: <defaults>
</compile_context>

<pallas_src>
import jax
import jax.numpy as jnp
import numpy as np
from jax import lax
from jax.experimental import pallas as pl
from jax.experimental.pallas import tpu as pltpu


def _wordwise_rnn_kernel(x_ref, h0_ref, c0_ref,
                         w0_ref, b0_ref, w1_ref, b1_ref,
                         wr_ref, wp_ref, br_ref, bp_ref,
                         out_ref, hn_ref, cn_ref,
                         h1_s, c1_s, h2_s, c2_s):
    blk = pl.program_id(0)
    n_blk = pl.num_programs(0)
    TB, B, _ = x_ref.shape
    H = h1_s.shape[-1]
    OP = out_ref.shape[-1]

    # Initialize the recurrent state from (h0, c0) on the first grid step.
    @pl.when(blk == 0)
    def _():
        h1_s[...] = h0_ref[0]
        c1_s[...] = c0_ref[0]
        h2_s[...] = h0_ref[1]
        c2_s[...] = c0_ref[1]

    # ---- loop-invariant values hoisted once per grid step (TB timesteps) ----
    w0 = w0_ref[...]                                       # (E+H, 4H) bf16, fused [Wih;Whh]^T
    w1 = w1_ref[...]                                       # (2H, 4H)  bf16
    wr = wr_ref[...]                                       # (H, OP)   bf16 (lane-padded head)
    wp = wp_ref[...]                                       # (H, OP)   bf16 (pair-swapped head)
    b0 = jnp.broadcast_to(b0_ref[...], (B, 4 * H))         # f32 bias broadcasts, hoisted
    b1 = jnp.broadcast_to(b1_ref[...], (B, 4 * H))
    br = jnp.broadcast_to(br_ref[...], (B, OP))
    bp = jnp.broadcast_to(bp_ref[...], (B, OP))

    # Gate-lane constants for the single full-width nonlinearity pass (PyTorch order i,f,g,o).
    lane = lax.broadcasted_iota(jnp.int32, (B, 4 * H), 1)
    is_g = (lane >= 2 * H) & (lane < 3 * H)
    gate_scale = jnp.where(is_g, 2.0, 1.0)

    def cell(xh_bf16, c, w_bf16, b):
        # One fused MXU dot per cell: [x, h] @ [W_ih^T; W_hh^T], f32 accumulation.
        z = jnp.dot(xh_bf16, w_bf16, preferred_element_type=jnp.float32) + b
        # One full-width sigmoid; recover tanh on g lanes via tanh(x) = 2*sigmoid(2x) - 1.
        s = jax.nn.sigmoid(z * gate_scale)
        act = jnp.where(is_g, 2.0 * s - 1.0, s)
        i = act[:, 0 * H:1 * H]
        f = act[:, 1 * H:2 * H]
        g = act[:, 2 * H:3 * H]
        o = act[:, 3 * H:4 * H]
        c_new = f * c + i * g
        h_new = o * jnp.tanh(c_new)
        return h_new, c_new

    def body(t, carry):
        h1, c1, h2, c2 = carry
        x_t = x_ref[t]                                                  # (B, E) bf16
        xh0 = jnp.concatenate([x_t, h1.astype(jnp.bfloat16)], axis=1)   # (B, E+H)
        h1, c1 = cell(xh0, c1, w0, b0)
        xh1 = jnp.concatenate([h1.astype(jnp.bfloat16),
                               h2.astype(jnp.bfloat16)], axis=1)        # (B, 2H)
        h2, c2 = cell(xh1, c2, w1, b1)

        # Linear head + pair-swapped head (independent dots; no pmat matmul on the crit path).
        h2b = h2.astype(jnp.bfloat16)
        logits = jnp.dot(h2b, wr, preferred_element_type=jnp.float32) + br
        partner = jnp.dot(h2b, wp, preferred_element_type=jnp.float32) + bp

        # log_softmax over adjacent pairs == -softplus(partner - logits), stable form.
        d = logits - partner
        out_ref[t] = jnp.minimum(d, 0.0) - jnp.log(1.0 + jnp.exp(-jnp.abs(d)))
        return (h1, c1, h2, c2)

    carry = (h1_s[...], c1_s[...], h2_s[...], c2_s[...])
    h1, c1, h2, c2 = lax.fori_loop(0, TB, body, carry, unroll=True)

    # Persist recurrent state for the next time-block.
    h1_s[...] = h1
    c1_s[...] = c1
    h2_s[...] = h2
    c2_s[...] = c2

    # Final (h_n, c_n) written on the last grid step.
    @pl.when(blk == n_blk - 1)
    def _():
        hn_ref[0] = h1
        hn_ref[1] = h2
        cn_ref[0] = c1
        cn_ref[1] = c2


def wordwise_rnn_forward(x, hidden_state, kparams, *, tb=None):
    h0, c0 = hidden_state
    T, B, E = x.shape
    H = h0.shape[-1]
    O = kparams["O"]
    OP = kparams["wr"].shape[-1]

    # Pick a time-block size (largest divisor of T up to 16; unrolled inside the kernel).
    if tb is None:
        tb = 1
        for d in range(1, min(T, 16) + 1):
            if T % d == 0:
                tb = d
    assert T % tb == 0
    n_blk = T // tb

    # bf16 operands for the MXU (halves x DMA bytes too); accumulation stays f32 in-kernel.
    x_bf = x.astype(jnp.bfloat16)

    def full(shape):
        n = len(shape)
        return pl.BlockSpec(shape, lambda i, n=n: (0,) * n)

    in_specs = [
        pl.BlockSpec((tb, B, E), lambda i: (i, 0, 0)),          # x slab (TB timesteps per step)
        full((2, B, H)), full((2, B, H)),                       # h0, c0
        full((E + H, 4 * H)), full((1, 4 * H)),                 # LSTM layer 0 (fused W, bias)
        full((2 * H, 4 * H)), full((1, 4 * H)),                 # LSTM layer 1 (fused W, bias)
        full((H, OP)), full((H, OP)),                           # head W, pair-swapped head W
        full((1, OP)), full((1, OP)),                           # head b, pair-swapped head b
    ]
    out_specs = [
        pl.BlockSpec((tb, B, OP), lambda i: (i, 0, 0)),         # lane-dense per-step log-probs
        full((2, B, H)),                                        # h_n (written on last step)
        full((2, B, H)),                                        # c_n
    ]
    out_shape = [
        jax.ShapeDtypeStruct((T, B, OP), jnp.float32),
        jax.ShapeDtypeStruct((2, B, H), jnp.float32),
        jax.ShapeDtypeStruct((2, B, H), jnp.float32),
    ]
    scratch_shapes = [pltpu.VMEM((B, H), jnp.float32)] * 4      # h1, c1, h2, c2

    logp_pad, hn, cn = pl.pallas_call(
        _wordwise_rnn_kernel,
        grid=(n_blk,),
        in_specs=in_specs,
        out_specs=out_specs,
        out_shape=out_shape,
        scratch_shapes=scratch_shapes,
        compiler_params=pltpu.CompilerParams(dimension_semantics=("arbitrary",)),
    )(x_bf, h0, c0,
      kparams["w0"], kparams["b0"], kparams["w1"], kparams["b1"],
      kparams["wr"], kparams["wp"], kparams["br"], kparams["bp"])

    # Slice off the lane padding, then the same flattening as output.view(-1, 2).
    logp = logp_pad[..., :O].reshape(-1, 2)
    return logp, (hn, cn)


def init_params(key, E, H, O):
    """Deterministic synthetic init mimicking nn.LSTM / nn.Linear (uniform +/- 1/sqrt(H)).

    Returns (kernel_params, reference_params): kernel params are fused/bf16/lane-padded,
    reference params are plain f32 transposed weights.
    """
    assert O % 2 == 0, "output_size must be even for .view(-1, 2)"
    ks = jax.random.split(key, 10)
    s = 1.0 / np.sqrt(H)

    def u(k, shape):
        return jax.random.uniform(k, shape, jnp.float32, -s, s)

    w_ih_l0 = u(ks[0], (4 * H, E))
    w_hh_l0 = u(ks[1], (4 * H, H))
    b_ih_l0 = u(ks[2], (4 * H,))
    b_hh_l0 = u(ks[3], (4 * H,))
    w_ih_l1 = u(ks[4], (4 * H, H))
    w_hh_l1 = u(ks[5], (4 * H, H))
    b_ih_l1 = u(ks[6], (4 * H,))
    b_hh_l1 = u(ks[7], (4 * H,))
    w_res = u(ks[8], (O, H))
    b_res = u(ks[9], (O,))

    rparams = {
        "w_ih_l0_t": w_ih_l0.T, "w_hh_l0_t": w_hh_l0.T,
        "b_l0": (b_ih_l0 + b_hh_l0).reshape(1, 4 * H),
        "w_ih_l1_t": w_ih_l1.T, "w_hh_l1_t": w_hh_l1.T,
        "b_l1": (b_ih_l1 + b_hh_l1).reshape(1, 4 * H),
        "w_result_t": w_res.T, "b_result": b_res.reshape(1, O),
    }

    # Kernel params: fused [Wih;Whh]^T, pre-permuted + lane-padded head, bf16 MXU operands.
    OP = ((O + 127) // 128) * 128
    perm = np.arange(O) ^ 1                              # swap adjacent pairs (0<->1, 2<->3, ...)
    wr_pad = jnp.zeros((H, OP), jnp.float32).at[:, :O].set(w_res.T)
    wp_pad = jnp.zeros((H, OP), jnp.float32).at[:, :O].set(w_res.T[:, perm])
    br_pad = jnp.zeros((1, OP), jnp.float32).at[:, :O].set(b_res.reshape(1, O))
    bp_pad = jnp.zeros((1, OP), jnp.float32).at[:, :O].set(b_res[perm].reshape(1, O))

    kparams = {
        "w0": jnp.concatenate([w_ih_l0.T, w_hh_l0.T], axis=0).astype(jnp.bfloat16),
        "b0": (b_ih_l0 + b_hh_l0).reshape(1, 4 * H),
        "w1": jnp.concatenate([w_ih_l1.T, w_hh_l1.T], axis=0).astype(jnp.bfloat16),
        "b1": (b_ih_l1 + b_hh_l1).reshape(1, 4 * H),
        "wr": wr_pad.astype(jnp.bfloat16),
        "wp": wp_pad.astype(jnp.bfloat16),
        "br": br_pad,
        "bp": bp_pad,
        "O": O,
    }
    return kparams, rparams


def reference_forward(x, hidden_state, params, H):
    """Pure-JAX f32 reference mirroring the PyTorch forward."""
    h0, c0 = hidden_state

    def cell(xt, h, c, wih_t, whh_t, b):
        z = xt @ wih_t + h @ whh_t + b
        i = jax.nn.sigmoid(z[:, :H])
        f = jax.nn.sigmoid(z[:, H:2 * H])
        g = jnp.tanh(z[:, 2 * H:3 * H])
        o = jax.nn.sigmoid(z[:, 3 * H:])
        c = f * c + i * g
        h = o * jnp.tanh(c)
        return h, c

    def step(carry, xt):
        h1, c1, h2, c2 = carry
        h1, c1 = cell(xt, h1, c1, params["w_ih_l0_t"], params["w_hh_l0_t"], params["b_l0"])
        h2, c2 = cell(h1, h2, c2, params["w_ih_l1_t"], params["w_hh_l1_t"], params["b_l1"])
        logits = h2 @ params["w_result_t"] + params["b_result"]
        return (h1, c1, h2, c2), logits

    (h1, c1, h2, c2), logits = lax.scan(step, (h0[0], c0[0], h0[1], c0[1]), x)
    logp = jax.nn.log_softmax(logits.reshape(-1, 2), axis=1)
    return logp, (jnp.stack([h1, h2]), jnp.stack([c1, c2]))


if __name__ == "__main__":
    # Small shapes consistent with the module: (seq, batch, embed=128), 2-layer LSTM, O=12.
    T, B, E, H, O = 8, 2, 128, 64, 12

    key = jax.random.PRNGKey(0)
    kp, kx = jax.random.split(key)
    kparams, rparams = init_params(kp, E, H, O)

    x = jax.random.normal(kx, (T, B, E), jnp.float32)
    h0 = jnp.zeros((2, B, H), jnp.float32)   # == initHidden() broadcast to batch B
    c0 = jnp.zeros((2, B, H), jnp.float32)

    # tb=4 -> 2 grid steps, exercising both the state-init and final hn/cn writeback paths.
    logp, (hn, cn) = wordwise_rnn_forward(x, (h0, c0), kparams, tb=4)
    jax.block_until_ready((logp, hn, cn))

    ref_logp, (ref_hn, ref_cn) = reference_forward(x, (h0, c0), rparams, H)

    assert logp.shape == (T * B * O // 2, 2)
    assert hn.shape == (2, B, H) and cn.shape == (2, B, H)
    assert bool(jnp.all(jnp.isfinite(logp)))
    np.testing.assert_allclose(np.asarray(logp), np.asarray(ref_logp), atol=5e-2, rtol=5e-2)
    np.testing.assert_allclose(np.asarray(hn), np.asarray(ref_hn), atol=5e-2, rtol=5e-2)
    np.testing.assert_allclose(np.asarray(cn), np.asarray(ref_cn), atol=5e-2, rtol=5e-2)

    print("KERNEL_OK")
</pallas_src>

<mosaic_0001>
module attributes {stable_mosaic.version = 11 : i64} {
  func.func @_wordwise_rnn_kernel(%arg0: i32, %arg1: memref<4x2x128xbf16, #tpu.memory_space<vmem>>, %arg2: memref<2x2x64xf32, #tpu.memory_space<vmem>>, %arg3: memref<2x2x64xf32, #tpu.memory_space<vmem>>, %arg4: memref<192x256xbf16, #tpu.memory_space<vmem>>, %arg5: memref<1x256xf32, #tpu.memory_space<vmem>>, %arg6: memref<128x256xbf16, #tpu.memory_space<vmem>>, %arg7: memref<1x256xf32, #tpu.memory_space<vmem>>, %arg8: memref<64x128xbf16, #tpu.memory_space<vmem>>, %arg9: memref<64x128xbf16, #tpu.memory_space<vmem>>, %arg10: memref<1x128xf32, #tpu.memory_space<vmem>>, %arg11: memref<1x128xf32, #tpu.memory_space<vmem>>, %arg12: memref<4x2x128xf32, #tpu.memory_space<vmem>>, %arg13: memref<2x2x64xf32, #tpu.memory_space<vmem>>, %arg14: memref<2x2x64xf32, #tpu.memory_space<vmem>>, %arg15: memref<2x64xf32, #tpu.memory_space<vmem>>, %arg16: memref<2x64xf32, #tpu.memory_space<vmem>>, %arg17: memref<2x64xf32, #tpu.memory_space<vmem>>, %arg18: memref<2x64xf32, #tpu.memory_space<vmem>>) attributes {dimension_semantics = [#tpu.dimension_semantics<arbitrary>], iteration_bounds = array<i64: 2>, scalar_prefetch = 0 : i64, scratch_operands = 4 : i64, tpu.core_type = #tpu.core_type<tc>, window_params = [{transform_indices = @transform_0, window_bounds = array<i64: 4, 2, 128>}, {pipeline_mode = #tpu.pipeline_mode<synchronous>, transform_indices = @transform_1, window_bounds = array<i64: 2, 2, 64>}, {pipeline_mode = #tpu.pipeline_mode<synchronous>, transform_indices = @transform_2, window_bounds = array<i64: 2, 2, 64>}, {pipeline_mode = #tpu.pipeline_mode<synchronous>, transform_indices = @transform_3, window_bounds = array<i64: 192, 256>}, {pipeline_mode = #tpu.pipeline_mode<synchronous>, transform_indices = @transform_4, window_bounds = array<i64: 1, 256>}, {pipeline_mode = #tpu.pipeline_mode<synchronous>, transform_indices = @transform_5, window_bounds = array<i64: 128, 256>}, {pipeline_mode = #tpu.pipeline_mode<synchronous>, transform_indices = @transform_6, window_bounds = array<i64: 1, 256>}, {pipeline_mode = #tpu.pipeline_mode<synchronous>, transform_indices = @transform_7, window_bounds = array<i64: 64, 128>}, {pipeline_mode = #tpu.pipeline_mode<synchronous>, transform_indices = @transform_8, window_bounds = array<i64: 64, 128>}, {pipeline_mode = #tpu.pipeline_mode<synchronous>, transform_indices = @transform_9, window_bounds = array<i64: 1, 128>}, {pipeline_mode = #tpu.pipeline_mode<synchronous>, transform_indices = @transform_10, window_bounds = array<i64: 1, 128>}, {transform_indices = @transform_11, window_bounds = array<i64: 4, 2, 128>}, {pipeline_mode = #tpu.pipeline_mode<synchronous>, transform_indices = @transform_12, window_bounds = array<i64: 2, 2, 64>}, {pipeline_mode = #tpu.pipeline_mode<synchronous>, transform_indices = @transform_13, window_bounds = array<i64: 2, 2, 64>}]} {
    %c0_i32 = arith.constant 0 : i32
    %0 = arith.cmpi eq, %arg0, %c0_i32 : i32
    %1 = arith.extui %0 : i1 to i32
    %c0_i32_0 = arith.constant 0 : i32
    %2 = arith.cmpi ne, %1, %c0_i32_0 : i32
    scf.if %2 {
      %c0_104 = arith.constant 0 : index
      %c0_105 = arith.constant 0 : index
      %c0_106 = arith.constant 0 : index
      %327 = vector.load %arg2[%c0_104, %c0_105, %c0_106] : memref<2x2x64xf32, #tpu.memory_space<vmem>>, vector<1x2x64xf32>
      %328 = vector.shape_cast %327 : vector<1x2x64xf32> to vector<2x64xf32>
      %c0_107 = arith.constant 0 : index
      %c0_108 = arith.constant 0 : index
      %329 = vector.load %arg15[%c0_107, %c0_108] : memref<2x64xf32, #tpu.memory_space<vmem>>, vector<2x64xf32>
      tpu.vector_store %arg15[%c0_107, %c0_108], %328 {strides = array<i32>} : memref<2x64xf32, #tpu.memory_space<vmem>>, vector<2x64xf32>,
      %c0_109 = arith.constant 0 : index
      %c0_110 = arith.constant 0 : index
      %c0_111 = arith.constant 0 : index
      %330 = vector.load %arg3[%c0_109, %c0_110, %c0_111] : memref<2x2x64xf32, #tpu.memory_space<vmem>>, vector<1x2x64xf32>
      %331 = vector.shape_cast %330 : vector<1x2x64xf32> to vector<2x64xf32>
      %c0_112 = arith.constant 0 : index
      %c0_113 = arith.constant 0 : index
      %332 = vector.load %arg16[%c0_112, %c0_113] : memref<2x64xf32, #tpu.memory_space<vmem>>, vector<2x64xf32>
      tpu.vector_store %arg16[%c0_112, %c0_113], %331 {strides = array<i32>} : memref<2x64xf32, #tpu.memory_space<vmem>>, vector<2x64xf32>,
      %c1 = arith.constant 1 : index
      %c0_114 = arith.constant 0 : index
      %c0_115 = arith.constant 0 : index
      %333 = vector.load %arg2[%c1, %c0_114, %c0_115] : memref<2x2x64xf32, #tpu.memory_space<vmem>>, vector<1x2x64xf32>
      %334 = vector.shape_cast %333 : vector<1x2x64xf32> to vector<2x64xf32>
      %c0_116 = arith.constant 0 : index
      %c0_117 = arith.constant 0 : index
      %335 = vector.load %arg17[%c0_116, %c0_117] : memref<2x64xf32, #tpu.memory_space<vmem>>, vector<2x64xf32>
      tpu.vector_store %arg17[%c0_116, %c0_117], %334 {strides = array<i32>} : memref<2x64xf32, #tpu.memory_space<vmem>>, vector<2x64xf32>,
      %c1_118 = arith.constant 1 : index
      %c0_119 = arith.constant 0 : index
      %c0_120 = arith.constant 0 : index
      %336 = vector.load %arg3[%c1_118, %c0_119, %c0_120] : memref<2x2x64xf32, #tpu.memory_space<vmem>>, vector<1x2x64xf32>
      %337 = vector.shape_cast %336 : vector<1x2x64xf32> to vector<2x64xf32>
      %c0_121 = arith.constant 0 : index
      %c0_122 = arith.constant 0 : index
      %338 = vector.load %arg18[%c0_121, %c0_122] : memref<2x64xf32, #tpu.memory_space<vmem>>, vector<2x64xf32>
      tpu.vector_store %arg18[%c0_121, %c0_122], %337 {strides = array<i32>} : memref<2x64xf32, #tpu.memory_space<vmem>>, vector<2x64xf32>,
    } else {
    }
    %c0 = arith.constant 0 : index
    %c0_1 = arith.constant 0 : index
    %3 = vector.load %arg4[%c0, %c0_1] : memref<192x256xbf16, #tpu.memory_space<vmem>>, vector<192x256xbf16>
    %c0_2 = arith.constant 0 : index
    %c0_3 = arith.constant 0 : index
    %4 = vector.load %arg6[%c0_2, %c0_3] : memref<128x256xbf16, #tpu.memory_space<vmem>>, vector<128x256xbf16>
    %c0_4 = arith.constant 0 : index
    %c0_5 = arith.constant 0 : index
    %5 = vector.load %arg8[%c0_4, %c0_5] : memref<64x128xbf16, #tpu.memory_space<vmem>>, vector<64x128xbf16>
    %c0_6 = arith.constant 0 : index
    %c0_7 = arith.constant 0 : index
    %6 = vector.load %arg9[%c0_6, %c0_7] : memref<64x128xbf16, #tpu.memory_space<vmem>>, vector<64x128xbf16>
    %c0_8 = arith.constant 0 : index
    %c0_9 = arith.constant 0 : index
    %7 = vector.load %arg5[%c0_8, %c0_9] : memref<1x256xf32, #tpu.memory_space<vmem>>, vector<1x256xf32>
    %8 = vector.shape_cast %7 : vector<1x256xf32> to vector<1x256xf32>
    %9 = vector.broadcast %8 : vector<1x256xf32> to vector<2x256xf32>
    %c0_10 = arith.constant 0 : index
    %c0_11 = arith.constant 0 : index
    %10 = vector.load %arg7[%c0_10, %c0_11] : memref<1x256xf32, #tpu.memory_space<vmem>>, vector<1x256xf32>
    %11 = vector.shape_cast %10 : vector<1x256xf32> to vector<1x256xf32>
    %12 = vector.broadcast %11 : vector<1x256xf32> to vector<2x256xf32>
    %c0_12 = arith.constant 0 : index
    %c0_13 = arith.constant 0 : index
    %13 = vector.load %arg10[%c0_12, %c0_13] : memref<1x128xf32, #tpu.memory_space<vmem>>, vector<1x128xf32>
    %14 = vector.shape_cast %13 : vector<1x128xf32> to vector<1x128xf32>
    %15 = vector.broadcast %14 : vector<1x128xf32> to vector<2x128xf32>
    %c0_14 = arith.constant 0 : index
    %c0_15 = arith.constant 0 : index
    %16 = vector.load %arg11[%c0_14, %c0_15] : memref<1x128xf32, #tpu.memory_space<vmem>>, vector<1x128xf32>
    %17 = vector.shape_cast %16 : vector<1x128xf32> to vector<1x128xf32>
    %18 = vector.broadcast %17 : vector<1x128xf32> to vector<2x128xf32>
    %19 = tpu.iota {dimensions = array<i32: 1>} : vector<2x256xi32>
    %c128_i32 = arith.constant 128 : i32
    %20 = vector.broadcast %c128_i32 : i32 to vector<2x256xi32>
    %21 = arith.cmpi sge, %19, %20 : vector<2x256xi32>
    %c192_i32 = arith.constant 192 : i32
    %22 = vector.broadcast %c192_i32 : i32 to vector<2x256xi32>
    %23 = arith.cmpi slt, %19, %22 : vector<2x256xi32>
    %24 = arith.andi %21, %23 : vector<2x256xi1>
    %cst = arith.constant 2.000000e+00 : f32
    %cst_16 = arith.constant 1.000000e+00 : f32
    %25 = vector.broadcast %cst : f32 to vector<2x256xf32>
    %26 = vector.broadcast %cst_16 : f32 to vector<2x256xf32>
    %27 = arith.select %24, %25, %26 : vector<2x256xi1>, vector<2x256xf32>
    %c0_17 = arith.constant 0 : index
    %c0_18 = arith.constant 0 : index
    %28 = vector.load %arg15[%c0_17, %c0_18] : memref<2x64xf32, #tpu.memory_space<vmem>>, vector<2x64xf32>
    %c0_19 = arith.constant 0 : index
    %c0_20 = arith.constant 0 : index
    %29 = vector.load %arg16[%c0_19, %c0_20] : memref<2x64xf32, #tpu.memory_space<vmem>>, vector<2x64xf32>
    %c0_21 = arith.constant 0 : index
    %c0_22 = arith.constant 0 : index
    %30 = vector.load %arg17[%c0_21, %c0_22] : memref<2x64xf32, #tpu.memory_space<vmem>>, vector<2x64xf32>
    %c0_23 = arith.constant 0 : index
    %c0_24 = arith.constant 0 : index
    %31 = vector.load %arg18[%c0_23, %c0_24] : memref<2x64xf32, #tpu.memory_space<vmem>>, vector<2x64xf32>
    %c0_i32_25 = arith.constant 0 : i32
    %32 = arith.index_cast %c0_i32_25 : i32 to index
    %c0_26 = arith.constant 0 : index
    %c0_27 = arith.constant 0 : index
    %33 = vector.load %arg1[%32, %c0_26, %c0_27] : memref<4x2x128xbf16, #tpu.memory_space<vmem>>, vector<1x2x128xbf16>
    %34 = vector.shape_cast %33 : vector<1x2x128xbf16> to vector<2x128xbf16>
    %35 = arith.truncf %28 : vector<2x64xf32> to vector<2x64xbf16>
    %36 = tpu.concatenate %34, %35 in 1 : vector<2x128xbf16>, vector<2x64xbf16> -> vector<2x192xbf16>
    %cst_28 = arith.constant dense<0.000000e+00> : vector<2x256xf32>
    %37 = tpu.matmul %36, %3, %cst_28 {dimension_numbers = #tpu.dot_dimension_numbers<[1], [0], [0], [1], [0, 0, 1, 1], [], []>} : vector<2x192xbf16>, vector<192x256xbf16>, vector<2x256xf32> -> vector<2x256xf32>
    %38 = arith.addf %37, %9 : vector<2x256xf32>
    %39 = arith.mulf %38, %27 : vector<2x256xf32>
    %40 = arith.negf %39 : vector<2x256xf32>
    %41 = math.exp %40 : vector<2x256xf32>
    %cst_29 = arith.constant 1.000000e+00 : f32
    %42 = vector.broadcast %cst_29 : f32 to vector<2x256xf32>
    %43 = arith.addf %42, %41 : vector<2x256xf32>
    %44 = arith.divf %42, %43 : vector<2x256xf32>
    %cst_30 = arith.constant 2.000000e+00 : f32
    %45 = vector.broadcast %cst_30 : f32 to vector<2x256xf32>
    %46 = arith.mulf %45, %44 : vector<2x256xf32>
    %cst_31 = arith.constant 1.000000e+00 : f32
    %47 = vector.broadcast %cst_31 : f32 to vector<2x256xf32>
    %48 = arith.subf %46, %47 : vector<2x256xf32>
    %49 = arith.select %24, %48, %44 : vector<2x256xi1>, vector<2x256xf32>
    %50 = vector.extract_strided_slice %49 {offsets = [0, 0], sizes = [2, 64], strides = [1, 1]} : vector<2x256xf32> to vector<2x64xf32>
    %51 = vector.extract_strided_slice %49 {offsets = [0, 64], sizes = [2, 64], strides = [1, 1]} : vector<2x256xf32> to vector<2x64xf32>
    %52 = vector.extract_strided_slice %49 {offsets = [0, 128], sizes = [2, 64], strides = [1, 1]} : vector<2x256xf32> to vector<2x64xf32>
    %53 = vector.extract_strided_slice %49 {offsets = [0, 192], sizes = [2, 64], strides = [1, 1]} : vector<2x256xf32> to vector<2x64xf32>
    %54 = arith.mulf %51, %29 : vector<2x64xf32>
    %55 = arith.mulf %50, %52 : vector<2x64xf32>
    %56 = arith.addf %54, %55 : vector<2x64xf32>
    %57 = math.tanh %56 : vector<2x64xf32>
    %58 = arith.mulf %53, %57 : vector<2x64xf32>
    %59 = arith.truncf %58 : vector<2x64xf32> to vector<2x64xbf16>
    %60 = arith.truncf %30 : vector<2x64xf32> to vector<2x64xbf16>
    %61 = tpu.concatenate %59, %60 in 1 : vector<2x64xbf16>, vector<2x64xbf16> -> vector<2x128xbf16>
    %cst_32 = arith.constant dense<0.000000e+00> : vector<2x256xf32>
    %62 = tpu.matmul %61, %4, %cst_32 {dimension_numbers = #tpu.dot_dimension_numbers<[1], [0], [0], [1], [0, 0, 1, 1], [], []>} : vector<2x128xbf16>, vector<128x256xbf16>, vector<2x256xf32> -> vector<2x256xf32>
    %63 = arith.addf %62, %12 : vector<2x256xf32>
    %64 = arith.mulf %63, %27 : vector<2x256xf32>
    %65 = arith.negf %64 : vector<2x256xf32>
    %66 = math.exp %65 : vector<2x256xf32>
    %cst_33 = arith.constant 1.000000e+00 : f32
    %67 = vector.broadcast %cst_33 : f32 to vector<2x256xf32>
    %68 = arith.addf %67, %66 : vector<2x256xf32>
    %69 = arith.divf %67, %68 : vector<2x256xf32>
    %cst_34 = arith.constant 2.000000e+00 : f32
    %70 = vector.broadcast %cst_34 : f32 to vector<2x256xf32>
    %71 = arith.mulf %70, %69 : vector<2x256xf32>
    %cst_35 = arith.constant 1.000000e+00 : f32
    %72 = vector.broadcast %cst_35 : f32 to vector<2x256xf32>
    %73 = arith.subf %71, %72 : vector<2x256xf32>
    %74 = arith.select %24, %73, %69 : vector<2x256xi1>, vector<2x256xf32>
    %75 = vector.extract_strided_slice %74 {offsets = [0, 0], sizes = [2, 64], strides = [1, 1]} : vector<2x256xf32> to vector<2x64xf32>
    %76 = vector.extract_strided_slice %74 {offsets = [0, 64], sizes = [2, 64], strides = [1, 1]} : vector<2x256xf32> to vector<2x64xf32>
    %77 = vector.extract_strided_slice %74 {offsets = [0, 128], sizes = [2, 64], strides = [1, 1]} : vector<2x256xf32> to vector<2x64xf32>
    %78 = vector.extract_strided_slice %74 {offsets = [0, 192], sizes = [2, 64], strides = [1, 1]} : vector<2x256xf32> to vector<2x64xf32>
    %79 = arith.mulf %76, %31 : vector<2x64xf32>
    %80 = arith.mulf %75, %77 : vector<2x64xf32>
    %81 = arith.addf %79, %80 : vector<2x64xf32>
    %82 = math.tanh %81 : vector<2x64xf32>
    %83 = arith.mulf %78, %82 : vector<2x64xf32>
    %84 = arith.truncf %83 : vector<2x64xf32> to vector<2x64xbf16>
    %cst_36 = arith.constant dense<0.000000e+00> : vector<2x128xf32>
    %85 = tpu.matmul %84, %5, %cst_36 {dimension_numbers = #tpu.dot_dimension_numbers<[1], [0], [0], [1], [0, 0, 1, 1], [], []>} : vector<2x64xbf16>, vector<64x128xbf16>, vector<2x128xf32> -> vector<2x128xf32>
    %86 = arith.addf %85, %15 : vector<2x128xf32>
    %cst_37 = arith.constant dense<0.000000e+00> : vector<2x128xf32>
    %87 = tpu.matmul %84, %6, %cst_37 {dimension_numbers = #tpu.dot_dimension_numbers<[1], [0], [0], [1], [0, 0, 1, 1], [], []>} : vector<2x64xbf16>, vector<64x128xbf16>, vector<2x128xf32> -> vector<2x128xf32>
    %88 = arith.addf %87, %18 : vector<2x128xf32>
    %89 = arith.subf %86, %88 : vector<2x128xf32>
    %cst_38 = arith.constant 0.000000e+00 : f32
    %90 = vector.broadcast %cst_38 : f32 to vector<2x128xf32>
    %91 = arith.minimumf %89, %90 : vector<2x128xf32>
    %92 = math.absf %89 : vector<2x128xf32>
    %cst_39 = arith.constant 0.000000e+00 : f32
    %93 = vector.broadcast %cst_39 : f32 to vector<2x128xf32>
    %94 = arith.subf %93, %92 : vector<2x128xf32>
    %95 = math.exp %94 : vector<2x128xf32>
    %cst_40 = arith.constant 1.000000e+00 : f32
    %96 = vector.broadcast %cst_40 : f32 to vector<2x128xf32>
    %97 = arith.addf %96, %95 : vector<2x128xf32>
    %98 = math.log %97 : vector<2x128xf32>
    %99 = arith.subf %91, %98 : vector<2x128xf32>
    %100 = arith.index_cast %c0_i32_25 : i32 to index
    %c0_41 = arith.constant 0 : index
    %c0_42 = arith.constant 0 : index
    %101 = vector.load %arg12[%100, %c0_41, %c0_42] : memref<4x2x128xf32, #tpu.memory_space<vmem>>, vector<1x2x128xf32>
    %102 = vector.shape_cast %101 : vector<1x2x128xf32> to vector<2x128xf32>
    %103 = vector.shape_cast %99 : vector<2x128xf32> to vector<1x2x128xf32>
    tpu.vector_store %arg12[%100, %c0_41, %c0_42], %103 {strides = array<i32>} : memref<4x2x128xf32, #tpu.memory_space<vmem>>, vector<1x2x128xf32>,
    %c1_i32 = arith.constant 1 : i32
    %104 = arith.index_cast %c1_i32 : i32 to index
    %c0_43 = arith.constant 0 : index
    %c0_44 = arith.constant 0 : index
    %105 = vector.load %arg1[%104, %c0_43, %c0_44] : memref<4x2x128xbf16, #tpu.memory_space<vmem>>, vector<1x2x128xbf16>
    %106 = vector.shape_cast %105 : vector<1x2x128xbf16> to vector<2x128xbf16>
    %107 = arith.truncf %58 : vector<2x64xf32> to vector<2x64xbf16>
    %108 = tpu.concatenate %106, %107 in 1 : vector<2x128xbf16>, vector<2x64xbf16> -> vector<2x192xbf16>
    %cst_45 = arith.constant dense<0.000000e+00> : vector<2x256xf32>
    %109 = tpu.matmul %108, %3, %cst_45 {dimension_numbers = #tpu.dot_dimension_numbers<[1], [0], [0], [1], [0, 0, 1, 1], [], []>} : vector<2x192xbf16>, vector<192x256xbf16>, vector<2x256xf32> -> vector<2x256xf32>
    %110 = arith.addf %109, %9 : vector<2x256xf32>
    %111 = arith.mulf %110, %27 : vector<2x256xf32>
    %112 = arith.negf %111 : vector<2x256xf32>
    %113 = math.exp %112 : vector<2x256xf32>
    %cst_46 = arith.constant 1.000000e+00 : f32
    %114 = vector.broadcast %cst_46 : f32 to vector<2x256xf32>
    %115 = arith.addf %114, %113 : vector<2x256xf32>
    %116 = arith.divf %114, %115 : vector<2x256xf32>
    %cst_47 = arith.constant 2.000000e+00 : f32
    %117 = vector.broadcast %cst_47 : f32 to vector<2x256xf32>
    %118 = arith.mulf %117, %116 : vector<2x256xf32>
    %cst_48 = arith.constant 1.000000e+00 : f32
    %119 = vector.broadcast %cst_48 : f32 to vector<2x256xf32>
    %120 = arith.subf %118, %119 : vector<2x256xf32>
    %121 = arith.select %24, %120, %116 : vector<2x256xi1>, vector<2x256xf32>
    %122 = vector.extract_strided_slice %121 {offsets = [0, 0], sizes = [2, 64], strides = [1, 1]} : vector<2x256xf32> to vector<2x64xf32>
    %123 = vector.extract_strided_slice %121 {offsets = [0, 64], sizes = [2, 64], strides = [1, 1]} : vector<2x256xf32> to vector<2x64xf32>
    %124 = vector.extract_strided_slice %121 {offsets = [0, 128], sizes = [2, 64], strides = [1, 1]} : vector<2x256xf32> to vector<2x64xf32>
    %125 = vector.extract_strided_slice %121 {offsets = [0, 192], sizes = [2, 64], strides = [1, 1]} : vector<2x256xf32> to vector<2x64xf32>
    %126 = arith.mulf %123, %56 : vector<2x64xf32>
    %127 = arith.mulf %122, %124 : vector<2x64xf32>
    %128 = arith.addf %126, %127 : vector<2x64xf32>
    %129 = math.tanh %128 : vector<2x64xf32>
    %130 = arith.mulf %125, %129 : vector<2x64xf32>
    %131 = arith.truncf %130 : vector<2x64xf32> to vector<2x64xbf16>
    %132 = arith.truncf %83 : vector<2x64xf32> to vector<2x64xbf16>
    %133 = tpu.concatenate %131, %132 in 1 : vector<2x64xbf16>, vector<2x64xbf16> -> vector<2x128xbf16>
    %cst_49 = arith.constant dense<0.000000e+00> : vector<2x256xf32>
    %134 = tpu.matmul %133, %4, %cst_49 {dimension_numbers = #tpu.dot_dimension_numbers<[1], [0], [0], [1], [0, 0, 1, 1], [], []>} : vector<2x128xbf16>, vector<128x256xbf16>, vector<2x256xf32> -> vector<2x256xf32>
    %135 = arith.addf %134, %12 : vector<2x256xf32>
    %136 = arith.mulf %135, %27 : vector<2x256xf32>
    %137 = arith.negf %136 : vector<2x256xf32>
    %138 = math.exp %137 : vector<2x256xf32>
    %cst_50 = arith.constant 1.000000e+00 : f32
    %139 = vector.broadcast %cst_50 : f32 to vector<2x256xf32>
    %140 = arith.addf %139, %138 : vector<2x256xf32>
    %141 = arith.divf %139, %140 : vector<2x256xf32>
    %cst_51 = arith.constant 2.000000e+00 : f32
    %142 = vector.broadcast %cst_51 : f32 to vector<2x256xf32>
    %143 = arith.mulf %142, %141 : vector<2x256xf32>
    %cst_52 = arith.constant 1.000000e+00 : f32
    %144 = vector.broadcast %cst_52 : f32 to vector<2x256xf32>
    %145 = arith.subf %143, %144 : vector<2x256xf32>
    %146 = arith.select %24, %145, %141 : vector<2x256xi1>, vector<2x256xf32>
    %147 = vector.extract_strided_slice %146 {offsets = [0, 0], sizes = [2, 64], strides = [1, 1]} : vector<2x256xf32> to vector<2x64xf32>
    %148 = vector.extract_strided_slice %146 {offsets = [0, 64], sizes = [2, 64], strides = [1, 1]} : vector<2x256xf32> to vector<2x64xf32>
    %149 = vector.extract_strided_slice %146 {offsets = [0, 128], sizes = [2, 64], strides = [1, 1]} : vector<2x256xf32> to vector<2x64xf32>
    %150 = vector.extract_strided_slice %146 {offsets = [0, 192], sizes = [2, 64], strides = [1, 1]} : vector<2x256xf32> to vector<2x64xf32>
    %151 = arith.mulf %148, %81 : vector<2x64xf32>
    %152 = arith.mulf %147, %149 : vector<2x64xf32>
    %153 = arith.addf %151, %152 : vector<2x64xf32>
    %154 = math.tanh %153 : vector<2x64xf32>
    %155 = arith.mulf %150, %154 : vector<2x64xf32>
    %156 = arith.truncf %155 : vector<2x64xf32> to vector<2x64xbf16>
    %cst_53 = arith.constant dense<0.000000e+00> : vector<2x128xf32>
    %157 = tpu.matmul %156, %5, %cst_53 {dimension_numbers = #tpu.dot_dimension_numbers<[1], [0], [0], [1], [0, 0, 1, 1], [], []>} : vector<2x64xbf16>, vector<64x128xbf16>, vector<2x128xf32> -> vector<2x128xf32>
    %158 = arith.addf %157, %15 : vector<2x128xf32>
    %cst_54 = arith.constant dense<0.000000e+00> : vector<2x128xf32>
    %159 = tpu.matmul %156, %6, %cst_54 {dimension_numbers = #tpu.dot_dimension_numbers<[1], [0], [0], [1], [0, 0, 1, 1], [], []>} : vector<2x64xbf16>, vector<64x128xbf16>, vector<2x128xf32> -> vector<2x128xf32>
    %160 = arith.addf %159, %18 : vector<2x128xf32>
    %161 = arith.subf %158, %160 : vector<2x128xf32>
    %cst_55 = arith.constant 0.000000e+00 : f32
    %162 = vector.broadcast %cst_55 : f32 to vector<2x128xf32>
    %163 = arith.minimumf %161, %162 : vector<2x128xf32>
    %164 = math.absf %161 : vector<2x128xf32>
    %cst_56 = arith.constant 0.000000e+00 : f32
    %165 = vector.broadcast %cst_56 : f32 to vector<2x128xf32>
    %166 = arith.subf %165, %164 : vector<2x128xf32>
    %167 = math.exp %166 : vector<2x128xf32>
    %cst_57 = arith.constant 1.000000e+00 : f32
    %168 = vector.broadcast %cst_57 : f32 to vector<2x128xf32>
    %169 = arith.addf %168, %167 : vector<2x128xf32>
    %170 = math.log %169 : vector<2x128xf32>
    %171 = arith.subf %163, %170 : vector<2x128xf32>
    %172 = arith.index_cast %c1_i32 : i32 to index
    %c0_58 = arith.constant 0 : index
    %c0_59 = arith.constant 0 : index
    %173 = vector.load %arg12[%172, %c0_58, %c0_59] : memref<4x2x128xf32, #tpu.memory_space<vmem>>, vector<1x2x128xf32>
    %174 = vector.shape_cast %173 : vector<1x2x128xf32> to vector<2x128xf32>
    %175 = vector.shape_cast %171 : vector<2x128xf32> to vector<1x2x128xf32>
    tpu.vector_store %arg12[%172, %c0_58, %c0_59], %175 {strides = array<i32>} : memref<4x2x128xf32, #tpu.memory_space<vmem>>, vector<1x2x128xf32>,
    %c2_i32 = arith.constant 2 : i32
    %176 = arith.index_cast %c2_i32 : i32 to index
    %c0_60 = arith.constant 0 : index
    %c0_61 = arith.constant 0 : index
    %177 = vector.load %arg1[%176, %c0_60, %c0_61] : memref<4x2x128xbf16, #tpu.memory_space<vmem>>, vector<1x2x128xbf16>
    %178 = vector.shape_cast %177 : vector<1x2x128xbf16> to vector<2x128xbf16>
    %179 = arith.truncf %130 : vector<2x64xf32> to vector<2x64xbf16>
    %180 = tpu.concatenate %178, %179 in 1 : vector<2x128xbf16>, vector<2x64xbf16> -> vector<2x192xbf16>
    %cst_62 = arith.constant dense<0.000000e+00> : vector<2x256xf32>
    %181 = tpu.matmul %180, %3, %cst_62 {dimension_numbers = #tpu.dot_dimension_numbers<[1], [0], [0], [1], [0, 0, 1, 1], [], []>} : vector<2x192xbf16>, vector<192x256xbf16>, vector<2x256xf32> -> vector<2x256xf32>
    %182 = arith.addf %181, %9 : vector<2x256xf32>
    %183 = arith.mulf %182, %27 : vector<2x256xf32>
    %184 = arith.negf %183 : vector<2x256xf32>
    %185 = math.exp %184 : vector<2x256xf32>
    %cst_63 = arith.constant 1.000000e+00 : f32
    %186 = vector.broadcast %cst_63 : f32 to vector<2x256xf32>
    %187 = arith.addf %186, %185 : vector<2x256xf32>
    %188 = arith.divf %186, %187 : vector<2x256xf32>
    %cst_64 = arith.constant 2.000000e+00 : f32
    %189 = vector.broadcast %cst_64 : f32 to vector<2x256xf32>
    %190 = arith.mulf %189, %188 : vector<2x256xf32>
    %cst_65 = arith.constant 1.000000e+00 : f32
    %191 = vector.broadcast %cst_65 : f32 to vector<2x256xf32>
    %192 = arith.subf %190, %191 : vector<2x256xf32>
    %193 = arith.select %24, %192, %188 : vector<2x256xi1>, vector<2x256xf32>
    %194 = vector.extract_strided_slice %193 {offsets = [0, 0], sizes = [2, 64], strides = [1, 1]} : vector<2x256xf32> to vector<2x64xf32>
    %195 = vector.extract_strided_slice %193 {offsets = [0, 64], sizes = [2, 64], strides = [1, 1]} : vector<2x256xf32> to vector<2x64xf32>
    %196 = vector.extract_strided_slice %193 {offsets = [0, 128], sizes = [2, 64], strides = [1, 1]} : vector<2x256xf32> to vector<2x64xf32>
    %197 = vector.extract_strided_slice %193 {offsets = [0, 192], sizes = [2, 64], strides = [1, 1]} : vector<2x256xf32> to vector<2x64xf32>
    %198 = arith.mulf %195, %128 : vector<2x64xf32>
    %199 = arith.mulf %194, %196 : vector<2x64xf32>
    %200 = arith.addf %198, %199 : vector<2x64xf32>
    %201 = math.tanh %200 : vector<2x64xf32>
    %202 = arith.mulf %197, %201 : vector<2x64xf32>
    %203 = arith.truncf %202 : vector<2x64xf32> to vector<2x64xbf16>
    %204 = arith.truncf %155 : vector<2x64xf32> to vector<2x64xbf16>
    %205 = tpu.concatenate %203, %204 in 1 : vector<2x64xbf16>, vector<2x64xbf16> -> vector<2x128xbf16>
    %cst_66 = arith.constant dense<0.000000e+00> : vector<2x256xf32>
    %206 = tpu.matmul %205, %4, %cst_66 {dimension_numbers = #tpu.dot_dimension_numbers<[1], [0], [0], [1], [0, 0, 1, 1], [], []>} : vector<2x128xbf16>, vector<128x256xbf16>, vector<2x256xf32> -> vector<2x256xf32>
    %207 = arith.addf %206, %12 : vector<2x256xf32>
    %208 = arith.mulf %207, %27 : vector<2x256xf32>
    %209 = arith.negf %208 : vector<2x256xf32>
    %210 = math.exp %209 : vector<2x256xf32>
    %cst_67 = arith.constant 1.000000e+00 : f32
    %211 = vector.broadcast %cst_67 : f32 to vector<2x256xf32>
    %212 = arith.addf %211, %210 : vector<2x256xf32>
    %213 = arith.divf %211, %212 : vector<2x256xf32>
    %cst_68 = arith.constant 2.000000e+00 : f32
    %214 = vector.broadcast %cst_68 : f32 to vector<2x256xf32>
    %215 = arith.mulf %214, %213 : vector<2x256xf32>
    %cst_69 = arith.constant 1.000000e+00 : f32
    %216 = vector.broadcast %cst_69 : f32 to vector<2x256xf32>
    %217 = arith.subf %215, %216 : vector<2x256xf32>
    %218 = arith.select %24, %217, %213 : vector<2x256xi1>, vector<2x256xf32>
    %219 = vector.extract_strided_slice %218 {offsets = [0, 0], sizes = [2, 64], strides = [1, 1]} : vector<2x256xf32> to vector<2x64xf32>
    %220 = vector.extract_strided_slice %218 {offsets = [0, 64], sizes = [2, 64], strides = [1, 1]} : vector<2x256xf32> to vector<2x64xf32>
    %221 = vector.extract_strided_slice %218 {offsets = [0, 128], sizes = [2, 64], strides = [1, 1]} : vector<2x256xf32> to vector<2x64xf32>
    %222 = vector.extract_strided_slice %218 {offsets = [0, 192], sizes = [2, 64], strides = [1, 1]} : vector<2x256xf32> to vector<2x64xf32>
    %223 = arith.mulf %220, %153 : vector<2x64xf32>
    %224 = arith.mulf %219, %221 : vector<2x64xf32>
    %225 = arith.addf %223, %224 : vector<2x64xf32>
    %226 = math.tanh %225 : vector<2x64xf32>
    %227 = arith.mulf %222, %226 : vector<2x64xf32>
    %228 = arith.truncf %227 : vector<2x64xf32> to vector<2x64xbf16>
    %cst_70 = arith.constant dense<0.000000e+00> : vector<2x128xf32>
    %229 = tpu.matmul %228, %5, %cst_70 {dimension_numbers = #tpu.dot_dimension_numbers<[1], [0], [0], [1], [0, 0, 1, 1], [], []>} : vector<2x64xbf16>, vector<64x128xbf16>, vector<2x128xf32> -> vector<2x128xf32>
    %230 = arith.addf %229, %15 : vector<2x128xf32>
    %cst_71 = arith.constant dense<0.000000e+00> : vector<2x128xf32>
    %231 = tpu.matmul %228, %6, %cst_71 {dimension_numbers = #tpu.dot_dimension_numbers<[1], [0], [0], [1], [0, 0, 1, 1], [], []>} : vector<2x64xbf16>, vector<64x128xbf16>, vector<2x128xf32> -> vector<2x128xf32>
    %232 = arith.addf %231, %18 : vector<2x128xf32>
    %233 = arith.subf %230, %232 : vector<2x128xf32>
    %cst_72 = arith.constant 0.000000e+00 : f32
    %234 = vector.broadcast %cst_72 : f32 to vector<2x128xf32>
    %235 = arith.minimumf %233, %234 : vector<2x128xf32>
    %236 = math.absf %233 : vector<2x128xf32>
    %cst_73 = arith.constant 0.000000e+00 : f32
    %237 = vector.broadcast %cst_73 : f32 to vector<2x128xf32>
    %238 = arith.subf %237, %236 : vector<2x128xf32>
    %239 = math.exp %238 : vector<2x128xf32>
    %cst_74 = arith.constant 1.000000e+00 : f32
    %240 = vector.broadcast %cst_74 : f32 to vector<2x128xf32>
    %241 = arith.addf %240, %239 : vector<2x128xf32>
    %242 = math.log %241 : vector<2x128xf32>
    %243 = arith.subf %235, %242 : vector<2x128xf32>
    %244 = arith.index_cast %c2_i32 : i32 to index
    %c0_75 = arith.constant 0 : index
    %c0_76 = arith.constant 0 : index
    %245 = vector.load %arg12[%244, %c0_75, %c0_76] : memref<4x2x128xf32, #tpu.memory_space<vmem>>, vector<1x2x128xf32>
    %246 = vector.shape_cast %245 : vector<1x2x128xf32> to vector<2x128xf32>
    %247 = vector.shape_cast %243 : vector<2x128xf32> to vector<1x2x128xf32>
    tpu.vector_store %arg12[%244, %c0_75, %c0_76], %247 {strides = array<i32>} : memref<4x2x128xf32, #tpu.memory_space<vmem>>, vector<1x2x128xf32>,
    %c3_i32 = arith.constant 3 : i32
    %248 = arith.index_cast %c3_i32 : i32 to index
    %c0_77 = arith.constant 0 : index
    %c0_78 = arith.constant 0 : index
    %249 = vector.load %arg1[%248, %c0_77, %c0_78] : memref<4x2x128xbf16, #tpu.memory_space<vmem>>, vector<1x2x128xbf16>
    %250 = vector.shape_cast %249 : vector<1x2x128xbf16> to vector<2x128xbf16>
    %251 = arith.truncf %202 : vector<2x64xf32> to vector<2x64xbf16>
    %252 = tpu.concatenate %250, %251 in 1 : vector<2x128xbf16>, vector<2x64xbf16> -> vector<2x192xbf16>
    %cst_79 = arith.constant dense<0.000000e+00> : vector<2x256xf32>
    %253 = tpu.matmul %252, %3, %cst_79 {dimension_numbers = #tpu.dot_dimension_numbers<[1], [0], [0], [1], [0, 0, 1, 1], [], []>} : vector<2x192xbf16>, vector<192x256xbf16>, vector<2x256xf32> -> vector<2x256xf32>
    %254 = arith.addf %253, %9 : vector<2x256xf32>
    %255 = arith.mulf %254, %27 : vector<2x256xf32>
    %256 = arith.negf %255 : vector<2x256xf32>
    %257 = math.exp %256 : vector<2x256xf32>
    %cst_80 = arith.constant 1.000000e+00 : f32
    %258 = vector.broadcast %cst_80 : f32 to vector<2x256xf32>
    %259 = arith.addf %258, %257 : vector<2x256xf32>
    %260 = arith.divf %258, %259 : vector<2x256xf32>
    %cst_81 = arith.constant 2.000000e+00 : f32
    %261 = vector.broadcast %cst_81 : f32 to vector<2x256xf32>
    %262 = arith.mulf %261, %260 : vector<2x256xf32>
    %cst_82 = arith.constant 1.000000e+00 : f32
    %263 = vector.broadcast %cst_82 : f32 to vector<2x256xf32>
    %264 = arith.subf %262, %263 : vector<2x256xf32>
    %265 = arith.select %24, %264, %260 : vector<2x256xi1>, vector<2x256xf32>
    %266 = vector.extract_strided_slice %265 {offsets = [0, 0], sizes = [2, 64], strides = [1, 1]} : vector<2x256xf32> to vector<2x64xf32>
    %267 = vector.extract_strided_slice %265 {offsets = [0, 64], sizes = [2, 64], strides = [1, 1]} : vector<2x256xf32> to vector<2x64xf32>
    %268 = vector.extract_strided_slice %265 {offsets = [0, 128], sizes = [2, 64], strides = [1, 1]} : vector<2x256xf32> to vector<2x64xf32>
    %269 = vector.extract_strided_slice %265 {offsets = [0, 192], sizes = [2, 64], strides = [1, 1]} : vector<2x256xf32> to vector<2x64xf32>
    %270 = arith.mulf %267, %200 : vector<2x64xf32>
    %271 = arith.mulf %266, %268 : vector<2x64xf32>
    %272 = arith.addf %270, %271 : vector<2x64xf32>
    %273 = math.tanh %272 : vector<2x64xf32>
    %274 = arith.mulf %269, %273 : vector<2x64xf32>
    %275 = arith.truncf %274 : vector<2x64xf32> to vector<2x64xbf16>
    %276 = arith.truncf %227 : vector<2x64xf32> to vector<2x64xbf16>
    %277 = tpu.concatenate %275, %276 in 1 : vector<2x64xbf16>, vector<2x64xbf16> -> vector<2x128xbf16>
    %cst_83 = arith.constant dense<0.000000e+00> : vector<2x256xf32>
    %278 = tpu.matmul %277, %4, %cst_83 {dimension_numbers = #tpu.dot_dimension_numbers<[1], [0], [0], [1], [0, 0, 1, 1], [], []>} : vector<2x128xbf16>, vector<128x256xbf16>, vector<2x256xf32> -> vector<2x256xf32>
    %279 = arith.addf %278, %12 : vector<2x256xf32>
    %280 = arith.mulf %279, %27 : vector<2x256xf32>
    %281 = arith.negf %280 : vector<2x256xf32>
    %282 = math.exp %281 : vector<2x256xf32>
    %cst_84 = arith.constant 1.000000e+00 : f32
    %283 = vector.broadcast %cst_84 : f32 to vector<2x256xf32>
    %284 = arith.addf %283, %282 : vector<2x256xf32>
    %285 = arith.divf %283, %284 : vector<2x256xf32>
    %cst_85 = arith.constant 2.000000e+00 : f32
    %286 = vector.broadcast %cst_85 : f32 to vector<2x256xf32>
    %287 = arith.mulf %286, %285 : vector<2x256xf32>
    %cst_86 = arith.constant 1.000000e+00 : f32
    %288 = vector.broadcast %cst_86 : f32 to vector<2x256xf32>
    %289 = arith.subf %287, %288 : vector<2x256xf32>
    %290 = arith.select %24, %289, %285 : vector<2x256xi1>, vector<2x256xf32>
    %291 = vector.extract_strided_slice %290 {offsets = [0, 0], sizes = [2, 64], strides = [1, 1]} : vector<2x256xf32> to vector<2x64xf32>
    %292 = vector.extract_strided_slice %290 {offsets = [0, 64], sizes = [2, 64], strides = [1, 1]} : vector<2x256xf32> to vector<2x64xf32>
    %293 = vector.extract_strided_slice %290 {offsets = [0, 128], sizes = [2, 64], strides = [1, 1]} : vector<2x256xf32> to vector<2x64xf32>
    %294 = vector.extract_strided_slice %290 {offsets = [0, 192], sizes = [2, 64], strides = [1, 1]} : vector<2x256xf32> to vector<2x64xf32>
    %295 = arith.mulf %292, %225 : vector<2x64xf32>
    %296 = arith.mulf %291, %293 : vector<2x64xf32>
    %297 = arith.addf %295, %296 : vector<2x64xf32>
    %298 = math.tanh %297 : vector<2x64xf32>
    %299 = arith.mulf %294, %298 : vector<2x64xf32>
    %300 = arith.truncf %299 : vector<2x64xf32> to vector<2x64xbf16>
    %cst_87 = arith.constant dense<0.000000e+00> : vector<2x128xf32>
    %301 = tpu.matmul %300, %5, %cst_87 {dimension_numbers = #tpu.dot_dimension_numbers<[1], [0], [0], [1], [0, 0, 1, 1], [], []>} : vector<2x64xbf16>, vector<64x128xbf16>, vector<2x128xf32> -> vector<2x128xf32>
    %302 = arith.addf %301, %15 : vector<2x128xf32>
    %cst_88 = arith.constant dense<0.000000e+00> : vector<2x128xf32>
    %303 = tpu.matmul %300, %6, %cst_88 {dimension_numbers = #tpu.dot_dimension_numbers<[1], [0], [0], [1], [0, 0, 1, 1], [], []>} : vector<2x64xbf16>, vector<64x128xbf16>, vector<2x128xf32> -> vector<2x128xf32>
    %304 = arith.addf %303, %18 : vector<2x128xf32>
    %305 = arith.subf %302, %304 : vector<2x128xf32>
    %cst_89 = arith.constant 0.000000e+00 : f32
    %306 = vector.broadcast %cst_89 : f32 to vector<2x128xf32>
    %307 = arith.minimumf %305, %306 : vector<2x128xf32>
    %308 = math.absf %305 : vector<2x128xf32>
    %cst_90 = arith.constant 0.000000e+00 : f32
    %309 = vector.broadcast %cst_90 : f32 to vector<2x128xf32>
    %310 = arith.subf %309, %308 : vector<2x128xf32>
    %311 = math.exp %310 : vector<2x128xf32>
    %cst_91 = arith.constant 1.000000e+00 : f32
    %312 = vector.broadcast %cst_91 : f32 to vector<2x128xf32>
    %313 = arith.addf %312, %311 : vector<2x128xf32>
    %314 = math.log %313 : vector<2x128xf32>
    %315 = arith.subf %307, %314 : vector<2x128xf32>
    %316 = arith.index_cast %c3_i32 : i32 to index
    %c0_92 = arith.constant 0 : index
    %c0_93 = arith.constant 0 : index
    %317 = vector.load %arg12[%316, %c0_92, %c0_93] : memref<4x2x128xf32, #tpu.memory_space<vmem>>, vector<1x2x128xf32>
    %318 = vector.shape_cast %317 : vector<1x2x128xf32> to vector<2x128xf32>
    %319 = vector.shape_cast %315 : vector<2x128xf32> to vector<1x2x128xf32>
    tpu.vector_store %arg12[%316, %c0_92, %c0_93], %319 {strides = array<i32>} : memref<4x2x128xf32, #tpu.memory_space<vmem>>, vector<1x2x128xf32>,
    %c4_i32 = arith.constant 4 : i32
    %c0_94 = arith.constant 0 : index
    %c0_95 = arith.constant 0 : index
    %320 = vector.load %arg15[%c0_94, %c0_95] : memref<2x64xf32, #tpu.memory_space<vmem>>, vector<2x64xf32>
    tpu.vector_store %arg15[%c0_94, %c0_95], %274 {strides = array<i32>} : memref<2x64xf32, #tpu.memory_space<vmem>>, vector<2x64xf32>,
    %c0_96 = arith.constant 0 : index
    %c0_97 = arith.constant 0 : index
    %321 = vector.load %arg16[%c0_96, %c0_97] : memref<2x64xf32, #tpu.memory_space<vmem>>, vector<2x64xf32>
    tpu.vector_store %arg16[%c0_96, %c0_97], %272 {strides = array<i32>} : memref<2x64xf32, #tpu.memory_space<vmem>>, vector<2x64xf32>,
    %c0_98 = arith.constant 0 : index
    %c0_99 = arith.constant 0 : index
    %322 = vector.load %arg17[%c0_98, %c0_99] : memref<2x64xf32, #tpu.memory_space<vmem>>, vector<2x64xf32>
    tpu.vector_store %arg17[%c0_98, %c0_99], %299 {strides = array<i32>} : memref<2x64xf32, #tpu.memory_space<vmem>>, vector<2x64xf32>,
    %c0_100 = arith.constant 0 : index
    %c0_101 = arith.constant 0 : index
    %323 = vector.load %arg18[%c0_100, %c0_101] : memref<2x64xf32, #tpu.memory_space<vmem>>, vector<2x64xf32>
    tpu.vector_store %arg18[%c0_100, %c0_101], %297 {strides = array<i32>} : memref<2x64xf32, #tpu.memory_space<vmem>>, vector<2x64xf32>,
    %c1_i32_102 = arith.constant 1 : i32
    %324 = arith.cmpi eq, %arg0, %c1_i32_102 : i32
    %325 = arith.extui %324 : i1 to i32
    %c0_i32_103 = arith.constant 0 : i32
    %326 = arith.cmpi ne, %325, %c0_i32_103 : i32
    scf.if %326 {
      %c0_104 = arith.constant 0 : index
      %c0_105 = arith.constant 0 : index
      %c0_106 = arith.constant 0 : index
      %327 = vector.load %arg13[%c0_104, %c0_105, %c0_106] : memref<2x2x64xf32, #tpu.memory_space<vmem>>, vector<1x2x64xf32>
      %328 = vector.shape_cast %327 : vector<1x2x64xf32> to vector<2x64xf32>
      %329 = vector.shape_cast %274 : vector<2x64xf32> to vector<1x2x64xf32>
      tpu.vector_store %arg13[%c0_104, %c0_105, %c0_106], %329 {strides = array<i32>} : memref<2x2x64xf32, #tpu.memory_space<vmem>>, vector<1x2x64xf32>,
      %c1 = arith.constant 1 : index
      %c0_107 = arith.constant 0 : index
      %c0_108 = arith.constant 0 : index
      %330 = vector.load %arg13[%c1, %c0_107, %c0_108] : memref<2x2x64xf32, #tpu.memory_space<vmem>>, vector<1x2x64xf32>
      %331 = vector.shape_cast %330 : vector<1x2x64xf32> to vector<2x64xf32>
      %332 = vector.shape_cast %299 : vector<2x64xf32> to vector<1x2x64xf32>
      tpu.vector_store %arg13[%c1, %c0_107, %c0_108], %332 {strides = array<i32>} : memref<2x2x64xf32, #tpu.memory_space<vmem>>, vector<1x2x64xf32>,
      %c0_109 = arith.constant 0 : index
      %c0_110 = arith.constant 0 : index
      %c0_111 = arith.constant 0 : index
      %333 = vector.load %arg14[%c0_109, %c0_110, %c0_111] : memref<2x2x64xf32, #tpu.memory_space<vmem>>, vector<1x2x64xf32>
      %334 = vector.shape_cast %333 : vector<1x2x64xf32> to vector<2x64xf32>
      %335 = vector.shape_cast %272 : vector<2x64xf32> to vector<1x2x64xf32>
      tpu.vector_store %arg14[%c0_109, %c0_110, %c0_111], %335 {strides = array<i32>} : memref<2x2x64xf32, #tpu.memory_space<vmem>>, vector<1x2x64xf32>,
      %c1_112 = arith.constant 1 : index
      %c0_113 = arith.constant 0 : index
      %c0_114 = arith.constant 0 : index
      %336 = vector.load %arg14[%c1_112, %c0_113, %c0_114] : memref<2x2x64xf32, #tpu.memory_space<vmem>>, vector<1x2x64xf32>
      %337 = vector.shape_cast %336 : vector<1x2x64xf32> to vector<2x64xf32>
      %338 = vector.shape_cast %297 : vector<2x64xf32> to vector<1x2x64xf32>
      tpu.vector_store %arg14[%c1_112, %c0_113, %c0_114], %338 {strides = array<i32>} : memref<2x2x64xf32, #tpu.memory_space<vmem>>, vector<1x2x64xf32>,
    } else {
    }
    return
  }
  func.func @transform_0(%arg0: i32) -> (i32, i32, i32) {
    %c0_i32 = arith.constant 0 : i32
    %c0_i32_0 = arith.constant 0 : i32
    %c0_i32_1 = arith.constant 0 : i32
    return %arg0, %c0_i32, %c0_i32_0 : i32, i32, i32
  }
  func.func @transform_1(%arg0: i32) -> (i32, i32, i32) {
    %c0_i32 = arith.constant 0 : i32
    %c0_i32_0 = arith.constant 0 : i32
    %c0_i32_1 = arith.constant 0 : i32
    %c0_i32_2 = arith.constant 0 : i32
    return %c0_i32, %c0_i32_0, %c0_i32_1 : i32, i32, i32
  }
  func.func @transform_2(%arg0: i32) -> (i32, i32, i32) {
    %c0_i32 = arith.constant 0 : i32
    %c0_i32_0 = arith.constant 0 : i32
    %c0_i32_1 = arith.constant 0 : i32
    %c0_i32_2 = arith.constant 0 : i32
    return %c0_i32, %c0_i32_0, %c0_i32_1 : i32, i32, i32
  }
  func.func @transform_3(%arg0: i32) -> (i32, i32) {
    %c0_i32 = arith.constant 0 : i32
    %c0_i32_0 = arith.constant 0 : i32
    %c0_i32_1 = arith.constant 0 : i32
    return %c0_i32, %c0_i32_0 : i32, i32
  }
  func.func @transform_4(%arg0: i32) -> (i32, i32) {
    %c0_i32 = arith.constant 0 : i32
    %c0_i32_0 = arith.constant 0 : i32
    %c0_i32_1 = arith.constant 0 : i32
    return %c0_i32, %c0_i32_0 : i32, i32
  }
  func.func @transform_5(%arg0: i32) -> (i32, i32) {
    %c0_i32 = arith.constant 0 : i32
    %c0_i32_0 = arith.constant 0 : i32
    %c0_i32_1 = arith.constant 0 : i32
    return %c0_i32, %c0_i32_0 : i32, i32
  }
  func.func @transform_6(%arg0: i32) -> (i32, i32) {
    %c0_i32 = arith.constant 0 : i32
    %c0_i32_0 = arith.constant 0 : i32
    %c0_i32_1 = arith.constant 0 : i32
    return %c0_i32, %c0_i32_0 : i32, i32
  }
  func.func @transform_7(%arg0: i32) -> (i32, i32) {
    %c0_i32 = arith.constant 0 : i32
    %c0_i32_0 = arith.constant 0 : i32
    %c0_i32_1 = arith.constant 0 : i32
    return %c0_i32, %c0_i32_0 : i32, i32
  }
  func.func @transform_8(%arg0: i32) -> (i32, i32) {
    %c0_i32 = arith.constant 0 : i32
    %c0_i32_0 = arith.constant 0 : i32
    %c0_i32_1 = arith.constant 0 : i32
    return %c0_i32, %c0_i32_0 : i32, i32
  }
  func.func @transform_9(%arg0: i32) -> (i32, i32) {
    %c0_i32 = arith.constant 0 : i32
    %c0_i32_0 = arith.constant 0 : i32
    %c0_i32_1 = arith.constant 0 : i32
    return %c0_i32, %c0_i32_0 : i32, i32
  }
  func.func @transform_10(%arg0: i32) -> (i32, i32) {
    %c0_i32 = arith.constant 0 : i32
    %c0_i32_0 = arith.constant 0 : i32
    %c0_i32_1 = arith.constant 0 : i32
    return %c0_i32, %c0_i32_0 : i32, i32
  }
  func.func @transform_11(%arg0: i32) -> (i32, i32, i32) {
    %c0_i32 = arith.constant 0 : i32
    %c0_i32_0 = arith.constant 0 : i32
    %c0_i32_1 = arith.constant 0 : i32
    return %arg0, %c0_i32, %c0_i32_0 : i32, i32, i32
  }
  func.func @transform_12(%arg0: i32) -> (i32, i32, i32) {
    %c0_i32 = arith.constant 0 : i32
    %c0_i32_0 = arith.constant 0 : i32
    %c0_i32_1 = arith.constant 0 : i32
    %c0_i32_2 = arith.constant 0 : i32
    return %c0_i32, %c0_i32_0, %c0_i32_1 : i32, i32, i32
  }
  func.func @transform_13(%arg0: i32) -> (i32, i32, i32) {
    %c0_i32 = arith.constant 0 : i32
    %c0_i32_0 = arith.constant 0 : i32
    %c0_i32_1 = arith.constant 0 : i32
    %c0_i32_2 = arith.constant 0 : i32
    return %c0_i32, %c0_i32_0, %c0_i32_1 : i32, i32, i32
  }
}

</mosaic_0001>

<llo_original>
// kernel: tpu_custom_call.1
$region0: #{tpu_custom_call.1}
  #allocation0 [shape = 'u32[]', space=smem, size = 0x4, offset = 0x4, fixed_abs, tag = 'smem constant byte address 0x4 - core index']
  #allocation1 [shape = 'u32[72,128]{1,0:T(1,128)}', space=vmem, size = 0x9000, scoped, tag = 'internal scratch']
  #allocation2 [shape = 'f32[2,64]{1,0:T(2,128)}', space=vmem, size = 0x400, scoped, tag = 'scratch operand']
  #allocation3 [shape = 'f32[2,64]{1,0:T(2,128)}', space=vmem, size = 0x400, scoped, tag = 'scratch operand']
  #allocation4 [shape = 'f32[2,64]{1,0:T(2,128)}', space=vmem, size = 0x400, scoped, tag = 'scratch operand']
  #allocation5 [shape = 'f32[2,64]{1,0:T(2,128)}', space=vmem, size = 0x400, scoped, tag = 'scratch operand']
  %s0 = inlined_call_operand.hbm [shape: bf16[8,2,128], index: 0, kind: input, shape index: {}]
  %s1 = inlined_call_operand.hbm [shape: f32[2,2,64], index: 1, kind: input, shape index: {}]
  %s2 = inlined_call_operand.hbm [shape: f32[2,2,64], index: 2, kind: input, shape index: {}]
  %s3 = inlined_call_operand.hbm [shape: bf16[192,256], index: 3, kind: input, shape index: {}]
  %s4 = inlined_call_operand.vmem [shape: f32[1,256], index: 4, kind: input, shape index: {}]
  %s5 = inlined_call_operand.hbm [shape: bf16[128,256], index: 5, kind: input, shape index: {}]
  %s6 = inlined_call_operand.vmem [shape: f32[1,256], index: 6, kind: input, shape index: {}]
  %s7 = inlined_call_operand.hbm [shape: bf16[64,128], index: 7, kind: input, shape index: {}]
  %s8 = inlined_call_operand.hbm [shape: bf16[64,128], index: 8, kind: input, shape index: {}]
  %s9 = inlined_call_operand.vmem [shape: f32[1,128], index: 9, kind: input, shape index: {}]
  %s10 = inlined_call_operand.vmem [shape: f32[1,128], index: 10, kind: input, shape index: {}]
  %s11 = inlined_call_operand.hbm [shape: f32[8,2,128], index: 11, kind: output, shape index: {0}]
  %s12 = inlined_call_operand.hbm [shape: f32[2,2,64], index: 12, kind: output, shape index: {1}]
  %s13 = inlined_call_operand.hbm [shape: f32[2,2,64], index: 13, kind: output, shape index: {2}]
  %14 = xla_tuple %s11, %s12, %s13
  %s15 = sld [smem:[#allocation0]]
  $region129: #{tpu_custom_call.1} parent=0
    _
  %s17 = ssub.s32 1, %s15
  %s18 = scalar_select 0, %s17, %s15
  $region1: #{tpu_custom_call.1} parent=0
    #allocation6 [shape = 'u8[4096]{0}', space=vmem, size = 0x1000, scoped, tag = 'input window, operand 0']
    #allocation7 [shape = 's32[2]{0}', space=sflag, size = 0x8, scoped, tag = 'scoped memory for tpu_custom_call.1']
    #allocation8 [shape = 's32[2]{0}', space=sflag, size = 0x8, scoped, tag = 'scoped memory for tpu_custom_call.1']
    #allocation9 [shape = 'u8[2048]{0}', space=vmem, size = 0x800, scoped, tag = 'input window, operand 1, single buffered']
    #allocation10 [shape = 's32[1]{0}', space=sflag, size = 0x4, scoped, tag = 'scoped memory for tpu_custom_call.1']
    #allocation11 [shape = 'u8[2048]{0}', space=vmem, size = 0x800, scoped, tag = 'input window, operand 2, single buffered']
    #allocation12 [shape = 'u8[98304]{0}', space=vmem, size = 0x18000, scoped, tag = 'input window, operand 3, single buffered']
    #allocation13 [shape = 's32[1]{0}', space=sflag, size = 0x4, scoped, tag = 'scoped memory for tpu_custom_call.1']
    #allocation14 [shape = 'u8[65536]{0}', space=vmem, size = 0x10000, scoped, tag = 'input window, operand 5, single buffered']
    #allocation15 [shape = 'u8[16384]{0}', space=vmem, size = 0x4000, scoped, tag = 'input window, operand 7, single buffered']
    #allocation16 [shape = 's32[1]{0}', space=sflag, size = 0x4, scoped, tag = 'scoped memory for tpu_custom_call.1']
    #allocation17 [shape = 'u8[16384]{0}', space=vmem, size = 0x4000, scoped, tag = 'input window, operand 8, single buffered']
    #allocation18 [shape = 'u8[8192]{0}', space=vmem, size = 0x2000, scoped, tag = 'output window, operand 0']
    #allocation19 [shape = 'u8[2048]{0}', space=vmem, size = 0x800, scoped, tag = 'output window, operand 1, single buffered']
    #allocation20 [shape = 's32[1]{0}', space=sflag, size = 0x4, scoped, tag = 'scoped memory for tpu_custom_call.1']
    #allocation21 [shape = 'u8[2048]{0}', space=vmem, size = 0x800, scoped, tag = 'output window, operand 2, single buffered']
    %19 = vsyncpa [#allocation7], 0
    %s20 = scalar_lea.sflag [#allocation7], 1
    %21 = vsyncpa %s20, 0
    %22 = vsyncpa [#allocation10], 0
    %23 = vsyncpa [#allocation13], 0
    %24 = vsyncpa [#allocation16], 0
    %25 = vsyncpa [#allocation8], 0
    %s26 = scalar_lea.sflag [#allocation8], 1
    %27 = vsyncpa %s26, 0
    %28 = vsyncpa [#allocation20], 0
    loop: start=0, step=1, limit=4
    $region2: #{tpu_custom_call.1} parent=1 // loop_pre_header
      _
    $region3: #{tpu_custom_call.1} parent=1 // loop_header
      %s30 = sphi 0, %s34
      %p31 = scmp.ge.s32.totalorder %s30, 4
      %s40 = sphi 0, %s42
      %s43 = sphi 0, %s40
      %s44 = sphi 0, %s43
      %s60 = sphi 0, %s44
      %s64 = sphi 0, %s64
      %s66 = sphi 0, %s64
      %s67 = sphi 0, %s66
      %s81 = sphi 0, %s67
      %s85 = sphi 0, %s85
      %s87 = sphi 0, %s85
      %s88 = sphi 0, %s87
      %s102 = sphi 0, %s88
      %s106 = sphi 0, %s106
      %s108 = sphi 0, %s106
      %s109 = sphi 0, %s108
      %s123 = sphi 0, %s109
      %s127 = sphi 0, %s127
      %s129 = sphi 0, %s127
      %s130 = sphi 0, %s129
      %s144 = sphi 0, %s130
      %s148 = sphi 0, %s148
      %s150 = sphi 0, %s148
      %s151 = sphi 0, %s150
      %s165 = sphi 0, %s151
      %s169 = sphi 0, %s169
      %s171 = sphi 0, %s169
      %s172 = sphi 0, %s171
      %s186 = sphi 0, %s172
      %s190 = sphi 0, %s190
      %s192 = sphi 0, %s190
      %s193 = sphi 0, %s192
      %s207 = sphi 0, %s193
      %s211 = sphi 0, %s211
      %s213 = sphi 0, %s211
      %s214 = sphi 0, %s213
      %s228 = sphi 0, %s214
      %s232 = sphi 0, %s232
      %s234 = sphi 0, %s232
      %s235 = sphi 0, %s234
      %s249 = sphi 0, %s235
      %s253 = sphi 0, %s253
      %s255 = sphi 0, %s253
      %s256 = sphi 0, %s255
      %s270 = sphi 0, %s256
      %s276 = sphi 0, %s278
      %s279 = sphi 0, %s276
      %s280 = sphi 0, %s279
      %s296 = sphi 0, %s280
      %s300 = sphi 0, %s300
      %s302 = sphi 0, %s300
      %s303 = sphi 0, %s302
      %s317 = sphi 0, %s303
      %s321 = sphi 0, %s321
      %s323 = sphi 0, %s321
      %s324 = sphi 0, %s323
      %s338 = sphi 0, %s324
    $region4: #{tpu_custom_call.1} parent=1 // loop_header_branch
      %33 = sbr.rel (%p31) target = $region8
    $region5: #{tpu_custom_call.1} parent=1 // loop_body
      %s35 = ssub.s32 %s30, 1
      %s36 = ssub.s32 %s30, 2
      %s37 = sadd.s32 %s30, 1
      %s38 = ssub.s32 %s30, %s37
      %p39 = scmp.eq.s32.totalorder %s38, 0
      %s41 = sadd.s32 %s40, 1
      %s42 = scalar_select %p39, %s40, %s41
      %p45 = pneg %p39
      %p46 = scmp.eq.s32.totalorder %s30, 1
      %p47 = por %p45, %p46
      %p48 = scmp.ne.s32.totalorder %s40, %s43
      %p49 = scmp.eq.s32.totalorder %s30, 0
      %p50 = por %p48, %p49
      %p51 = scmp.ne.s32.totalorder %s40, %s43
      %p52 = scmp.eq.s32.totalorder %s35, 1
      %p53 = por %p51, %p52
      %p54 = scmp.ne.s32.totalorder %s43, %s44
      %p55 = scmp.eq.s32.totalorder %s35, 0
      %p56 = por %p54, %p55
      %p57 = scmp.ne.s32.totalorder %s43, %s44
      %p58 = scmp.eq.s32.totalorder %s36, 1
      %p59 = por %p57, %p58
      %p61 = scmp.ne.s32.totalorder %s44, %s60
      %p62 = scmp.eq.s32.totalorder %s36, 0
      %p63 = por %p61, %p62
      %s65 = sadd.s32 %s64, 1
      %p68 = scmp.eq.s32.totalorder %s30, 1
      %p69 = scmp.ne.s32.totalorder %s64, %s66
      %p70 = scmp.eq.s32.totalorder %s30, 0
      %p71 = por %p69, %p70
      %p72 = scmp.ne.s32.totalorder %s64, %s66
      %p73 = scmp.eq.s32.totalorder %s35, 1
      %p74 = por %p72, %p73
      %p75 = scmp.ne.s32.totalorder %s66, %s67
      %p76 = scmp.eq.s32.totalorder %s35, 0
      %p77 = por %p75, %p76
      %p78 = scmp.ne.s32.totalorder %s66, %s67
      %p79 = scmp.eq.s32.totalorder %s36, 1
      %p80 = por %p78, %p79
      %p82 = scmp.ne.s32.totalorder %s67, %s81
      %p83 = scmp.eq.s32.totalorder %s36, 0
      %p84 = por %p82, %p83
      %s86 = sadd.s32 %s85, 1
      %p89 = scmp.eq.s32.totalorder %s30, 1
      %p90 = scmp.ne.s32.totalorder %s85, %s87
      %p91 = scmp.eq.s32.totalorder %s30, 0
      %p92 = por %p90, %p91
      %p93 = scmp.ne.s32.totalorder %s85, %s87
      %p94 = scmp.eq.s32.totalorder %s35, 1
      %p95 = por %p93, %p94
      %p96 = scmp.ne.s32.totalorder %s87, %s88
      %p97 = scmp.eq.s32.totalorder %s35, 0
      %p98 = por %p96, %p97
      %p99 = scmp.ne.s32.totalorder %s87, %s88
      %p100 = scmp.eq.s32.totalorder %s36, 1
      %p101 = por %p99, %p100
      %p103 = scmp.ne.s32.totalorder %s88, %s102
      %p104 = scmp.eq.s32.totalorder %s36, 0
      %p105 = por %p103, %p104
      %s107 = sadd.s32 %s106, 1
      %p110 = scmp.eq.s32.totalorder %s30, 1
      %p111 = scmp.ne.s32.totalorder %s106, %s108
      %p112 = scmp.eq.s32.totalorder %s30, 0
      %p113 = por %p111, %p112
      %p114 = scmp.ne.s32.totalorder %s106, %s108
      %p115 = scmp.eq.s32.totalorder %s35, 1
      %p116 = por %p114, %p115
      %p117 = scmp.ne.s32.totalorder %s108, %s109
      %p118 = scmp.eq.s32.totalorder %s35, 0
      %p119 = por %p117, %p118
      %p120 = scmp.ne.s32.totalorder %s108, %s109
      %p121 = scmp.eq.s32.totalorder %s36, 1
      %p122 = por %p120, %p121
      %p124 = scmp.ne.s32.totalorder %s109, %s123
      %p125 = scmp.eq.s32.totalorder %s36, 0
      %p126 = por %p124, %p125
      %s128 = sadd.s32 %s127, 1
      %p131 = scmp.eq.s32.totalorder %s30, 1
      %p132 = scmp.ne.s32.totalorder %s127, %s129
      %p133 = scmp.eq.s32.totalorder %s30, 0
      %p134 = por %p132, %p133
      %p135 = scmp.ne.s32.totalorder %s127, %s129
      %p136 = scmp.eq.s32.totalorder %s35, 1
      %p137 = por %p135, %p136
      %p138 = scmp.ne.s32.totalorder %s129, %s130
      %p139 = scmp.eq.s32.totalorder %s35, 0
      %p140 = por %p138, %p139
      %p141 = scmp.ne.s32.totalorder %s129, %s130
      %p142 = scmp.eq.s32.totalorder %s36, 1
      %p143 = por %p141, %p142
      %p145 = scmp.ne.s32.totalorder %s130, %s144
      %p146 = scmp.eq.s32.totalorder %s36, 0
      %p147 = por %p145, %p146
      %s149 = sadd.s32 %s148, 1
      %p152 = scmp.eq.s32.totalorder %s30, 1
      %p153 = scmp.ne.s32.totalorder %s148, %s150
      %p154 = scmp.eq.s32.totalorder %s30, 0
      %p155 = por %p153, %p154
      %p156 = scmp.ne.s32.totalorder %s148, %s150
      %p157 = scmp.eq.s32.totalorder %s35, 1
      %p158 = por %p156, %p157
      %p159 = scmp.ne.s32.totalorder %s150, %s151
      %p160 = scmp.eq.s32.totalorder %s35, 0
      %p161 = por %p159, %p160
      %p162 = scmp.ne.s32.totalorder %s150, %s151
      %p163 = scmp.eq.s32.totalorder %s36, 1
      %p164 = por %p162, %p163
      %p166 = scmp.ne.s32.totalorder %s151, %s165
      %p167 = scmp.eq.s32.totalorder %s36, 0
      %p168 = por %p166, %p167
      %s170 = sadd.s32 %s169, 1
      %p173 = scmp.eq.s32.totalorder %s30, 1
      %p174 = scmp.ne.s32.totalorder %s169, %s171
      %p175 = scmp.eq.s32.totalorder %s30, 0
      %p176 = por %p174, %p175
      %p177 = scmp.ne.s32.totalorder %s169, %s171
      %p178 = scmp.eq.s32.totalorder %s35, 1
      %p179 = por %p177, %p178
      %p180 = scmp.ne.s32.totalorder %s171, %s172
      %p181 = scmp.eq.s32.totalorder %s35, 0
      %p182 = por %p180, %p181
      %p183 = scmp.ne.s32.totalorder %s171, %s172
      %p184 = scmp.eq.s32.totalorder %s36, 1
      %p185 = por %p183, %p184
      %p187 = scmp.ne.s32.totalorder %s172, %s186
      %p188 = scmp.eq.s32.totalorder %s36, 0
      %p189 = por %p187, %p188
      %s191 = sadd.s32 %s190, 1
      %p194 = scmp.eq.s32.totalorder %s30, 1
      %p195 = scmp.ne.s32.totalorder %s190, %s192
      %p196 = scmp.eq.s32.totalorder %s30, 0
      %p197 = por %p195, %p196
      %p198 = scmp.ne.s32.totalorder %s190, %s192
      %p199 = scmp.eq.s32.totalorder %s35, 1
      %p200 = por %p198, %p199
      %p201 = scmp.ne.s32.totalorder %s192, %s193
      %p202 = scmp.eq.s32.totalorder %s35, 0
      %p203 = por %p201, %p202
      %p204 = scmp.ne.s32.totalorder %s192, %s193
      %p205 = scmp.eq.s32.totalorder %s36, 1
      %p206 = por %p204, %p205
      %p208 = scmp.ne.s32.totalorder %s193, %s207
      %p209 = scmp.eq.s32.totalorder %s36, 0
      %p210 = por %p208, %p209
      %s212 = sadd.s32 %s211, 1
      %p215 = scmp.eq.s32.totalorder %s30, 1
      %p216 = scmp.ne.s32.totalorder %s211, %s213
      %p217 = scmp.eq.s32.totalorder %s30, 0
      %p218 = por %p216, %p217
      %p219 = scmp.ne.s32.totalorder %s211, %s213
      %p220 = scmp.eq.s32.totalorder %s35, 1
      %p221 = por %p219, %p220
      %p222 = scmp.ne.s32.totalorder %s213, %s214
      %p223 = scmp.eq.s32.totalorder %s35, 0
      %p224 = por %p222, %p223
      %p225 = scmp.ne.s32.totalorder %s213, %s214
      %p226 = scmp.eq.s32.totalorder %s36, 1
      %p227 = por %p225, %p226
      %p229 = scmp.ne.s32.totalorder %s214, %s228
      %p230 = scmp.eq.s32.totalorder %s36, 0
      %p231 = por %p229, %p230
      %s233 = sadd.s32 %s232, 1
      %p236 = scmp.eq.s32.totalorder %s30, 1
      %p237 = scmp.ne.s32.totalorder %s232, %s234
      %p238 = scmp.eq.s32.totalorder %s30, 0
      %p239 = por %p237, %p238
      %p240 = scmp.ne.s32.totalorder %s232, %s234
      %p241 = scmp.eq.s32.totalorder %s35, 1
      %p242 = por %p240, %p241
      %p243 = scmp.ne.s32.totalorder %s234, %s235
      %p244 = scmp.eq.s32.totalorder %s35, 0
      %p245 = por %p243, %p244
      %p246 = scmp.ne.s32.totalorder %s234, %s235
      %p247 = scmp.eq.s32.totalorder %s36, 1
      %p248 = por %p246, %p247
      %p250 = scmp.ne.s32.totalorder %s235, %s249
      %p251 = scmp.eq.s32.totalorder %s36, 0
      %p252 = por %p250, %p251
      %s254 = sadd.s32 %s253, 1
      %p257 = scmp.eq.s32.totalorder %s30, 1
      %p258 = scmp.ne.s32.totalorder %s253, %s255
      %p259 = scmp.eq.s32.totalorder %s30, 0
      %p260 = por %p258, %p259
      %p261 = scmp.ne.s32.totalorder %s253, %s255
      %p262 = scmp.eq.s32.totalorder %s35, 1
      %p263 = por %p261, %p262
      %p264 = scmp.ne.s32.totalorder %s255, %s256
      %p265 = scmp.eq.s32.totalorder %s35, 0
      %p266 = por %p264, %p265
      %p267 = scmp.ne.s32.totalorder %s255, %s256
      %p268 = scmp.eq.s32.totalorder %s36, 1
      %p269 = por %p267, %p268
      %p271 = scmp.ne.s32.totalorder %s256, %s270
      %p272 = scmp.eq.s32.totalorder %s36, 0
      %p273 = por %p271, %p272
      %s274 = ssub.s32 %s30, %s37
      %p275 = scmp.eq.s32.totalorder %s274, 0
      %s277 = sadd.s32 %s276, 1
      %s278 = scalar_select %p275, %s276, %s277
      %p281 = pneg %p275
      %p282 = scmp.eq.s32.totalorder %s30, 1
      %p283 = por %p281, %p282
      %p284 = scmp.ne.s32.totalorder %s276, %s279
      %p285 = scmp.eq.s32.totalorder %s30, 0
      %p286 = por %p284, %p285
      %p287 = scmp.ne.s32.totalorder %s276, %s279
      %p288 = scmp.eq.s32.totalorder %s35, 1
      %p289 = por %p287, %p288
      %p290 = scmp.ne.s32.totalorder %s279, %s280
      %p291 = scmp.eq.s32.totalorder %s35, 0
      %p292 = por %p290, %p291
      %p293 = scmp.ne.s32.totalorder %s279, %s280
      %p294 = scmp.eq.s32.totalorder %s36, 1
      %p295 = por %p293, %p294
      %p297 = scmp.ne.s32.totalorder %s280, %s296
      %p298 = scmp.eq.s32.totalorder %s36, 0
      %p299 = por %p297, %p298
      %s301 = sadd.s32 %s300, 1
      %p304 = scmp.eq.s32.totalorder %s30, 1
      %p305 = scmp.ne.s32.totalorder %s300, %s302
      %p306 = scmp.eq.s32.totalorder %s30, 0
      %p307 = por %p305, %p306
      %p308 = scmp.ne.s32.totalorder %s300, %s302
      %p309 = scmp.eq.s32.totalorder %s35, 1
      %p310 = por %p308, %p309
      %p311 = scmp.ne.s32.totalorder %s302, %s303
      %p312 = scmp.eq.s32.totalorder %s35, 0
      %p313 = por %p311, %p312
      %p314 = scmp.ne.s32.totalorder %s302, %s303
      %p315 = scmp.eq.s32.totalorder %s36, 1
      %p316 = por %p314, %p315
      %p318 = scmp.ne.s32.totalorder %s303, %s317
      %p319 = scmp.eq.s32.totalorder %s36, 0
      %p320 = por %p318, %p319
      %s322 = sadd.s32 %s321, 1
      %p325 = scmp.eq.s32.totalorder %s30, 1
      %p326 = scmp.ne.s32.totalorder %s321, %s323
      %p327 = scmp.eq.s32.totalorder %s30, 0
      %p328 = por %p326, %p327
      %p329 = scmp.ne.s32.totalorder %s321, %s323
      %p330 = scmp.eq.s32.totalorder %s35, 1
      %p331 = por %p329, %p330
      %p332 = scmp.ne.s32.totalorder %s323, %s324
      %p333 = scmp.eq.s32.totalorder %s35, 0
      %p334 = por %p332, %p333
      %p335 = scmp.ne.s32.totalorder %s323, %s324
      %p336 = scmp.eq.s32.totalorder %s36, 1
      %p337 = por %p335, %p336
      %p339 = scmp.ne.s32.totalorder %s324, %s338
      %p340 = scmp.eq.s32.totalorder %s36, 0
      %p341 = por %p339, %p340
      %p342 = scmp.le.s32.totalorder 1, %s30
      %p343 = scmp.lt.s32.totalorder %s30, 3
      %p344 = pnand %p342, %p343
      %p345 = pneg %p344
      // Predicated region
      $region9: #{tpu_custom_call.1} parent=5 // pred_check
        _
      $region10: #{tpu_custom_call.1} parent=5 // pred_check_branch
        %347 = sbr.rel (%p344) target = $region12
      $region11: #{tpu_custom_call.1} parent=5 // pred_region
        %s348 = ssub.s32 %s30, 1
        // Predicated region
        $region13: #{tpu_custom_call.1} parent=11 // pred_check
          %p349 = pneg %p77
        $region14: #{tpu_custom_call.1} parent=11 // pred_check_branch
          %351 = sbr.rel (%p349) target = $region16
        $region15: #{tpu_custom_call.1} parent=11 // pred_region
          %353 = vsyncadd [#allocation10], 0
          %s354 = sshll.u32 %s1, 4
          %s355 = int_to_ptr.hbm [resolvable:$true] %s354
          %s356 = sshll.u32 [#allocation9], 4
          %s357 = int_to_ptr.vmem [resolvable:$true] %s356
          %362 = dma.hbm_to_vmem [thread:$0]  %s355, 64, %s357, [#allocation10], 32, 32, 2
        $region16: #{tpu_custom_call.1} parent=11 // pred_fallthru
          _
        // Predicated region
        $region17: #{tpu_custom_call.1} parent=11 // pred_check
          %p363 = pneg %p98
        $region18: #{tpu_custom_call.1} parent=11 // pred_check_branch
          %365 = sbr.rel (%p363) target = $region20
        $region19: #{tpu_custom_call.1} parent=11 // pred_region
          %367 = vsyncadd [#allocation10], 0
          %s368 = sshll.u32 %s2, 4
          %s369 = int_to_ptr.hbm [resolvable:$true] %s368
          %s370 = sshll.u32 [#allocation11], 4
          %s371 = int_to_ptr.vmem [resolvable:$true] %s370
          %376 = dma.hbm_to_vmem [thread:$0]  %s369, 64, %s371, [#allocation10], 32, 32, 2
        $region20: #{tpu_custom_call.1} parent=11 // pred_fallthru
          _
        // Predicated region
        $region21: #{tpu_custom_call.1} parent=11 // pred_check
          %p377 = pneg %p119
        $region22: #{tpu_custom_call.1} parent=11 // pred_check_branch
          %379 = sbr.rel (%p377) target = $region24
        $region23: #{tpu_custom_call.1} parent=11 // pred_region
          %381 = vsyncadd [#allocation13], 0
          %s382 = sshll.u32 %s3, 4
          %s383 = int_to_ptr.hbm [resolvable:$true] %s382
          %s384 = sshll.u32 [#allocation12], 4
          %s385 = int_to_ptr.vmem [resolvable:$true] %s384
          %390 = dma.hbm_to_vmem [thread:$0]  %s383, 3072, %s385, [#allocation13], 128, 128, 8
        $region24: #{tpu_custom_call.1} parent=11 // pred_fallthru
          _
        // Predicated region
        $region25: #{tpu_custom_call.1} parent=11 // pred_check
          %p391 = pneg %p140
        $region26: #{tpu_custom_call.1} parent=11 // pred_check_branch
          %393 = sbr.rel (%p391) target = $region28
        $region27: #{tpu_custom_call.1} parent=11 // pred_region
          _
        $region28: #{tpu_custom_call.1} parent=11 // pred_fallthru
          _
        // Predicated region
        $region29: #{tpu_custom_call.1} parent=11 // pred_check
          %p394 = pneg %p161
        $region30: #{tpu_custom_call.1} parent=11 // pred_check_branch
          %396 = sbr.rel (%p394) target = $region32
        $region31: #{tpu_custom_call.1} parent=11 // pred_region
          %398 = vsyncadd [#allocation13], 0
          %s399 = sshll.u32 %s5, 4
          %s400 = int_to_ptr.hbm [resolvable:$true] %s399
          %s401 = sshll.u32 [#allocation14], 4
          %s402 = int_to_ptr.vmem [resolvable:$true] %s401
          %407 = dma.hbm_to_vmem [thread:$0]  %s400, 2048, %s402, [#allocation13], 128, 128, 8
        $region32: #{tpu_custom_call.1} parent=11 // pred_fallthru
          _
        // Predicated region
        $region33: #{tpu_custom_call.1} parent=11 // pred_check
          %p408 = pneg %p182
        $region34: #{tpu_custom_call.1} parent=11 // pred_check_branch
          %410 = sbr.rel (%p408) target = $region36
        $region35: #{tpu_custom_call.1} parent=11 // pred_region
          _
        $region36: #{tpu_custom_call.1} parent=11 // pred_fallthru
          _
        // Predicated region
        $region37: #{tpu_custom_call.1} parent=11 // pred_check
          %p411 = pneg %p203
        $region38: #{tpu_custom_call.1} parent=11 // pred_check_branch
          %413 = sbr.rel (%p411) target = $region40
        $region39: #{tpu_custom_call.1} parent=11 // pred_region
          %415 = vsyncadd [#allocation16], 0
          %s416 = sshll.u32 %s7, 4
          %s417 = int_to_ptr.hbm [resolvable:$true] %s416
          %s418 = sshll.u32 [#allocation15], 4
          %s419 = int_to_ptr.vmem [resolvable:$true] %s418
          %424 = dma.hbm_to_vmem [thread:$0]  %s417, 512, %s419, [#allocation16], 64, 64, 4
        $region40: #{tpu_custom_call.1} parent=11 // pred_fallthru
          _
        // Predicated region
        $region41: #{tpu_custom_call.1} parent=11 // pred_check
          %p425 = pneg %p224
        $region42: #{tpu_custom_call.1} parent=11 // pred_check_branch
          %427 = sbr.rel (%p425) target = $region44
        $region43: #{tpu_custom_call.1} parent=11 // pred_region
          %429 = vsyncadd [#allocation16], 0
          %s430 = sshll.u32 %s8, 4
          %s431 = int_to_ptr.hbm [resolvable:$true] %s430
          %s432 = sshll.u32 [#allocation17], 4
          %s433 = int_to_ptr.vmem [resolvable:$true] %s432
          %438 = dma.hbm_to_vmem [thread:$0]  %s431, 512, %s433, [#allocation16], 64, 64, 4
        $region44: #{tpu_custom_call.1} parent=11 // pred_fallthru
          _
        // Predicated region
        $region45: #{tpu_custom_call.1} parent=11 // pred_check
          %p439 = pneg %p245
        $region46: #{tpu_custom_call.1} parent=11 // pred_check_branch
          %441 = sbr.rel (%p439) target = $region48
        $region47: #{tpu_custom_call.1} parent=11 // pred_region
          _
        $region48: #{tpu_custom_call.1} parent=11 // pred_fallthru
          _
        // Predicated region
        $region49: #{tpu_custom_call.1} parent=11 // pred_check
          %p442 = pneg %p266
        $region50: #{tpu_custom_call.1} parent=11 // pred_check_branch
          %444 = sbr.rel (%p442) target = $region52
        $region51: #{tpu_custom_call.1} parent=11 // pred_region
          _
        $region52: #{tpu_custom_call.1} parent=11 // pred_fallthru
          _
      $region12: #{tpu_custom_call.1} parent=5 // pred_fallthru
        _
      %p445 = scmp.lt.s32.totalorder %s30, 2
      // Predicated region
      $region53: #{tpu_custom_call.1} parent=5 // pred_check
        %p446 = pneg %p445
      $region54: #{tpu_custom_call.1} parent=5 // pred_check_branch
        %448 = sbr.rel (%p446) target = $region56
      $region55: #{tpu_custom_call.1} parent=5 // pred_region
        // Predicated region
        $region57: #{tpu_custom_call.1} parent=55 // pred_check
          %p449 = pneg %p50
        $region58: #{tpu_custom_call.1} parent=55 // pred_check_branch
          %451 = sbr.rel (%p449) target = $region60
        $region59: #{tpu_custom_call.1} parent=55 // pred_region
          %s452 = sand.u32 %s40, 1
          %s453 = scalar_lea.sflag [#allocation7], %s452
          %s454 = sand.u32 %s40, 1
          %s455 = smul.addr %s454, 4
          %s456 = scalar_lea.vmem [#allocation6], %s455
          %s457 = smul.u32 4, %s30
          %459 = vsyncadd %s453, 0
          %s460 = scalar_lea.hbm %s0, %s457
          %s461 = sshll.u32 %s460, 4
          %s462 = int_to_ptr.hbm [resolvable:$true] %s461
          %s463 = sshll.u32 %s456, 4
          %s464 = int_to_ptr.vmem [resolvable:$true] %s463
          %469 = dma.hbm_to_vmem [thread:$0]  %s462, 64, %s464, %s453, 16, 16, 1
        $region60: #{tpu_custom_call.1} parent=55 // pred_fallthru
          _
      $region56: #{tpu_custom_call.1} parent=5 // pred_fallthru
        _
      %p470 = scmp.le.s32.totalorder 1, %s30
      %p471 = scmp.lt.s32.totalorder %s30, 3
      %p472 = pnand %p470, %p471
      %p473 = pneg %p472
      // Predicated region
      $region61: #{tpu_custom_call.1} parent=5 // pred_check
        _
      $region62: #{tpu_custom_call.1} parent=5 // pred_check_branch
        %475 = sbr.rel (%p472) target = $region64
      $region63: #{tpu_custom_call.1} parent=5 // pred_region
        %s476 = ssub.s32 %s30, 1
        %s477 = sand.u32 %s43, 1
        %s478 = scalar_lea.sflag [#allocation7], %s477
        %s479 = sand.u32 %s43, 1
        %s480 = smul.addr %s479, 4
        %s481 = scalar_lea.vmem [#allocation6], %s480
        // Predicated region
        $region65: #{tpu_custom_call.1} parent=63 // pred_check
          %p482 = pneg %p56
        $region66: #{tpu_custom_call.1} parent=63 // pred_check_branch
          %484 = sbr.rel (%p482) target = $region68
        $region67: #{tpu_custom_call.1} parent=63 // pred_region
          %486 = dma.done %s478, 64
        $region68: #{tpu_custom_call.1} parent=63 // pred_fallthru
          _
        // Predicated region
        $region69: #{tpu_custom_call.1} parent=63 // pred_check
          %p487 = pneg %p77
        $region70: #{tpu_custom_call.1} parent=63 // pred_check_branch
          %489 = sbr.rel (%p487) target = $region72
        $region71: #{tpu_custom_call.1} parent=63 // pred_region
          %491 = dma.done [#allocation10], 64
        $region72: #{tpu_custom_call.1} parent=63 // pred_fallthru
          _
        // Predicated region
        $region73: #{tpu_custom_call.1} parent=63 // pred_check
          %p492 = pneg %p98
        $region74: #{tpu_custom_call.1} parent=63 // pred_check_branch
          %494 = sbr.rel (%p492) target = $region76
        $region75: #{tpu_custom_call.1} parent=63 // pred_region
          %496 = dma.done [#allocation10], 64
        $region76: #{tpu_custom_call.1} parent=63 // pred_fallthru
          _
        // Predicated region
        $region77: #{tpu_custom_call.1} parent=63 // pred_check
          %p497 = pneg %p119
        $region78: #{tpu_custom_call.1} parent=63 // pred_check_branch
          %499 = sbr.rel (%p497) target = $region80
        $region79: #{tpu_custom_call.1} parent=63 // pred_region
          %501 = dma.done [#allocation13], 3072
        $region80: #{tpu_custom_call.1} parent=63 // pred_fallthru
          _
        // Predicated region
        $region81: #{tpu_custom_call.1} parent=63 // pred_check
          %p502 = pneg %p161
        $region82: #{tpu_custom_call.1} parent=63 // pred_check_branch
          %504 = sbr.rel (%p502) target = $region84
        $region83: #{tpu_custom_call.1} parent=63 // pred_region
          %506 = dma.done [#allocation13], 2048
        $region84: #{tpu_custom_call.1} parent=63 // pred_fallthru
          _
        // Predicated region
        $region85: #{tpu_custom_call.1} parent=63 // pred_check
          %p507 = pneg %p203
        $region86: #{tpu_custom_call.1} parent=63 // pred_check_branch
          %509 = sbr.rel (%p507) target = $region88
        $region87: #{tpu_custom_call.1} parent=63 // pred_region
          %511 = dma.done [#allocation16], 512
        $region88: #{tpu_custom_call.1} parent=63 // pred_fallthru
          _
        // Predicated region
        $region89: #{tpu_custom_call.1} parent=63 // pred_check
          %p512 = pneg %p224
        $region90: #{tpu_custom_call.1} parent=63 // pred_check_branch
          %514 = sbr.rel (%p512) target = $region92
        $region91: #{tpu_custom_call.1} parent=63 // pred_region
          %516 = dma.done [#allocation16], 512
        $region92: #{tpu_custom_call.1} parent=63 // pred_fallthru
          _
        %s517 = sand.u32 %s43, 1
        %s518 = scalar_lea.sflag [#allocation7], %s517
        %s519 = sand.u32 %s43, 1
        %s520 = smul.addr %s519, 4
        %s521 = scalar_lea.vmem [#allocation6], %s520
        %p522 = pneg %p56
        %p523 = pneg %p53
        %p524 = pneg %p77
        %p525 = pneg %p74
        %p526 = pneg %p98
        %p527 = pneg %p95
        %p528 = pneg %p119
        %p529 = pneg %p116
        %p530 = pneg %p140
        %p531 = pneg %p137
        %p532 = pneg %p161
        %p533 = pneg %p158
        %p534 = pneg %p182
        %p535 = pneg %p179
        %p536 = pneg %p203
        %p537 = pneg %p200
        %p538 = pneg %p224
        %p539 = pneg %p221
        %p540 = pneg %p245
        %p541 = pneg %p242
        %p542 = pneg %p266
        %p543 = pneg %p263
        %p544 = pneg %p292
        %p545 = pneg %p289
        %s546 = sand.u32 %s279, 1
        %s547 = scalar_lea.sflag [#allocation8], %s546
        %s548 = sand.u32 %s279, 1
        %s549 = smul.addr %s548, 8
        %s550 = scalar_lea.vmem [#allocation18], %s549
        %p551 = pneg %p313
        %p552 = pneg %p310
        %p553 = pneg %p334
        %p554 = pneg %p331
        %s555 = smul.u32 4, %s35
        %s556 = smul.u32 4, %s35
        %p558 = scmp.eq.s32.totalorder %s35, 0
        // Predicated region
        $region93: #{tpu_custom_call.1} parent=63 // pred_check
          %p559 = pneg %p558
        $region94: #{tpu_custom_call.1} parent=63 // pred_check_branch
          %561 = sbr.rel (%p559) target = $region96
        $region95: #{tpu_custom_call.1} parent=63 // pred_region
          %v562 = vld [vmem:[#allocation9] sm:$0x3]
          %vm563 = vcmask 517120
          %564 = vst.msk [vmem:[#allocation2] sm:$0x3] %vm563, %v562
          %v565 = vld [vmem:[#allocation11] sm:$0x3]
          %566 = vst.msk [vmem:[#allocation3] sm:$0x3] %vm563, %v565
          %s567 = scalar_lea.vmem [#allocation9], 2
          %v568 = vld [vmem:[%s567] sm:$0x3]
          %569 = vst.msk [vmem:[#allocation4] sm:$0x3] %vm563, %v568
          %s570 = scalar_lea.vmem [#allocation11], 2
          %v571 = vld [vmem:[%s570] sm:$0x3]
          %572 = vst.msk [vmem:[#allocation5] sm:$0x3] %vm563, %v571
        $region96: #{tpu_custom_call.1} parent=63 // pred_fallthru
          _
        %v573 = vld [vmem:[#allocation12] sm:$0xff]
        %v574 = vld [vmem:[#allocation12 + $0x8] sm:$0xff]
        %v575 = vld [vmem:[#allocation12 + $0x10] sm:$0xff]
        %v576 = vld [vmem:[#allocation12 + $0x18] sm:$0xff]
        %v577 = vld [vmem:[#allocation12 + $0x20] sm:$0xff]
        %v578 = vld [vmem:[#allocation12 + $0x28] sm:$0xff]
        %v579 = vld [vmem:[#allocation12 + $0x30] sm:$0xff]
        %v580 = vld [vmem:[#allocation12 + $0x38] sm:$0xff]
        %v581 = vld [vmem:[#allocation12 + $0x40] sm:$0xff]
        %v582 = vld [vmem:[#allocation12 + $0x48] sm:$0xff]
        %v583 = vld [vmem:[#allocation12 + $0x50] sm:$0xff]
        %v584 = vld [vmem:[#allocation12 + $0x58] sm:$0xff]
        %v585 = vld [vmem:[#allocation12 + $0x60] sm:$0xff]
        %v586 = vld [vmem:[#allocation12 + $0x68] sm:$0xff]
        %v587 = vld [vmem:[#allocation12 + $0x70] sm:$0xff]
        %v588 = vld [vmem:[#allocation12 + $0x78] sm:$0xff]
        %v589 = vld [vmem:[#allocation12 + $0x80] sm:$0xff]
        %v590 = vld [vmem:[#allocation12 + $0x88] sm:$0xff]
        %v591 = vld [vmem:[#allocation12 + $0x90] sm:$0xff]
        %v592 = vld [vmem:[#allocation12 + $0x98] sm:$0xff]
        %v593 = vld [vmem:[#allocation12 + $0xa0] sm:$0xff]
        %v594 = vld [vmem:[#allocation12 + $0xa8] sm:$0xff]
        %v595 = vld [vmem:[#allocation12 + $0xb0] sm:$0xff]
        %v596 = vld [vmem:[#allocation12 + $0xb8] sm:$0xff]
        %v597 = vld [vmem:[#allocation14] sm:$0xff]
        %v598 = vld [vmem:[#allocation14 + $0x8] sm:$0xff]
        %v599 = vld [vmem:[#allocation14 + $0x10] sm:$0xff]
        %v600 = vld [vmem:[#allocation14 + $0x18] sm:$0xff]
        %v601 = vld [vmem:[#allocation14 + $0x20] sm:$0xff]
        %v602 = vld [vmem:[#allocation14 + $0x28] sm:$0xff]
        %v603 = vld [vmem:[#allocation14 + $0x30] sm:$0xff]
        %v604 = vld [vmem:[#allocation14 + $0x38] sm:$0xff]
        %v605 = vld [vmem:[#allocation14 + $0x40] sm:$0xff]
        %v606 = vld [vmem:[#allocation14 + $0x48] sm:$0xff]
        %v607 = vld [vmem:[#allocation14 + $0x50] sm:$0xff]
        %v608 = vld [vmem:[#allocation14 + $0x58] sm:$0xff]
        %v609 = vld [vmem:[#allocation14 + $0x60] sm:$0xff]
        %v610 = vld [vmem:[#allocation14 + $0x68] sm:$0xff]
        %v611 = vld [vmem:[#allocation14 + $0x70] sm:$0xff]
        %v612 = vld [vmem:[#allocation14 + $0x78] sm:$0xff]
        %v613 = vld [vmem:[#allocation15] sm:$0xf]
        %v614 = vld [vmem:[#allocation15 + $0x4] sm:$0xf]
        %v615 = vld [vmem:[#allocation15 + $0x8] sm:$0xf]
        %v616 = vld [vmem:[#allocation15 + $0xc] sm:$0xf]
        %v617 = vld [vmem:[#allocation15 + $0x10] sm:$0xf]
        %v618 = vld [vmem:[#allocation15 + $0x14] sm:$0xf]
        %v619 = vld [vmem:[#allocation15 + $0x18] sm:$0xf]
        %v620 = vld [vmem:[#allocation15 + $0x1c] sm:$0xf]
        %v621 = vld [vmem:[#allocation17] sm:$0xf]
        %v622 = vld [vmem:[#allocation17 + $0x4] sm:$0xf]
        %v623 = vld [vmem:[#allocation17 + $0x8] sm:$0xf]
        %v624 = vld [vmem:[#allocation17 + $0xc] sm:$0xf]
        %v625 = vld [vmem:[#allocation17 + $0x10] sm:$0xf]
        %v626 = vld [vmem:[#allocation17 + $0x14] sm:$0xf]
        %v627 = vld [vmem:[#allocation17 + $0x18] sm:$0xf]
        %v628 = vld [vmem:[#allocation17 + $0x1c] sm:$0xf]
        %v629 = vld [vmem:[%s4] sm:$0x3]
        %v631 = vperm.slane %v629, 0
        %v632 = vperm.slane %v629, 1
        %v635 = vld [vmem:[%s6] sm:$0x3]
        %v637 = vperm.slane %v635, 0
        %v638 = vperm.slane %v635, 1
        %v641 = vld [vmem:[%s9] sm:$0x1]
        %v643 = vperm.slane %v641, 0
        %v645 = vld [vmem:[%s10] sm:$0x1]
        %v647 = vperm.slane %v645, 0
        %v649 = vlaneseq
        %v650 = vand.u32 %v649, 127
        %v651 = vadd.s32 %v650, 128
        %vm652 = vcmp.ge.s32.totalorder %v650, 128
        %vm653 = vcmp.ge.s32.totalorder %v651, 128
        %vm654 = vcmp.lt.s32.totalorder %v650, 192
        %vm655 = vcmp.lt.s32.totalorder %v651, 192
        %vm656 = vmand %vm652, %vm654
        %vm657 = vmand %vm653, %vm655
        %v658 = vsel %vm656, 2.0, 1.0
        %v659 = vsel %vm657, 2.0, 1.0
        %v660 = vld [vmem:[#allocation2] sm:$0x3]
        %v661 = vld [vmem:[#allocation3] sm:$0x3]
        %v662 = vld [vmem:[#allocation4] sm:$0x3]
        %v663 = vld [vmem:[#allocation5] sm:$0x3]
        %v664 = vld [vmem:[%s481] sm:$0x1]
        %v665 = vpack.c.bf16 %v660, %v660
        %v690 = vunpack.c.l.b16 %v573
        %v691 = vunpack.c.h.b16 %v573
        %v692 = vunpack.c.l.b16 %v574
        %v693 = vunpack.c.h.b16 %v574
        %v694 = vunpack.c.l.b16 %v575
        %v695 = vunpack.c.h.b16 %v575
        %v696 = vunpack.c.l.b16 %v576
        %v697 = vunpack.c.h.b16 %v576
        %v698 = vunpack.c.l.b16 %v577
        %v699 = vunpack.c.h.b16 %v577
        %v700 = vunpack.c.l.b16 %v578
        %v701 = vunpack.c.h.b16 %v578
        %v702 = vunpack.c.l.b16 %v579
        %v703 = vunpack.c.h.b16 %v579
        %v704 = vunpack.c.l.b16 %v580
        %v705 = vunpack.c.h.b16 %v580
        %v706 = vunpack.c.l.b16 %v581
        %v707 = vunpack.c.h.b16 %v581
        %v708 = vunpack.c.l.b16 %v582
        %v709 = vunpack.c.h.b16 %v582
        %v710 = vunpack.c.l.b16 %v583
        %v711 = vunpack.c.h.b16 %v583
        %v712 = vunpack.c.l.b16 %v584
        %v713 = vunpack.c.h.b16 %v584
        %v714 = vunpack.c.l.b16 %v585
        %v715 = vunpack.c.h.b16 %v585
        %v716 = vunpack.c.l.b16 %v586
        %v717 = vunpack.c.h.b16 %v586
        %v718 = vunpack.c.l.b16 %v587
        %v719 = vunpack.c.h.b16 %v587
        %v720 = vunpack.c.l.b16 %v588
        %v721 = vunpack.c.h.b16 %v588
        %v722 = vunpack.c.l.b16 %v589
        %v723 = vunpack.c.h.b16 %v589
        %v724 = vunpack.c.l.b16 %v590
        %v725 = vunpack.c.h.b16 %v590
        %v726 = vunpack.c.l.b16 %v591
        %v727 = vunpack.c.h.b16 %v591
        %v728 = vunpack.c.l.b16 %v592
        %v729 = vunpack.c.h.b16 %v592
        %v730 = vunpack.c.l.b16 %v593
        %v731 = vunpack.c.h.b16 %v593
        %v732 = vunpack.c.l.b16 %v594
        %v733 = vunpack.c.h.b16 %v594
        %v734 = vunpack.c.l.b16 %v595
        %v735 = vunpack.c.h.b16 %v595
        %v736 = vunpack.c.l.b16 %v596
        %v737 = vunpack.c.h.b16 %v596
        %v738 = vpack.c.b16 %v692, %v690
        %v739 = vpack.c.b16 %v693, %v691
        %v740 = vpack.c.b16 %v696, %v694
        %v741 = vpack.c.b16 %v697, %v695
        %v742 = vpack.c.b16 %v700, %v698
        %v743 = vpack.c.b16 %v701, %v699
        %v744 = vpack.c.b16 %v704, %v702
        %v745 = vpack.c.b16 %v705, %v703
        %v746 = vpack.c.b16 %v708, %v706
        %v747 = vpack.c.b16 %v709, %v707
        %v748 = vpack.c.b16 %v712, %v710
        %v749 = vpack.c.b16 %v713, %v711
        %v750 = vpack.c.b16 %v716, %v714
        %v751 = vpack.c.b16 %v717, %v715
        %v752 = vpack.c.b16 %v720, %v718
        %v753 = vpack.c.b16 %v721, %v719
        %v754 = vpack.c.b16 %v724, %v722
        %v755 = vpack.c.b16 %v725, %v723
        %v756 = vpack.c.b16 %v728, %v726
        %v757 = vpack.c.b16 %v729, %v727
        %v758 = vpack.c.b16 %v732, %v730
        %v759 = vpack.c.b16 %v733, %v731
        %v760 = vpack.c.b16 %v736, %v734
        %v761 = vpack.c.b16 %v737, %v735
        %vm786 = vcmask 523264
        %v788 = vsel %vm786, %v665, 0
        %790 = vmatpush.bf16.msra.mxu0 %v752
        %791 = vmatpush.bf16.msra.mxu0 %v750
        %792 = vmatpush.bf16.msra.mxu0 %v748
        %793 = vmatpush.bf16.msra.mxu0 %v746
        %794 = vmatpush.bf16.msra.mxu0 %v744
        %795 = vmatpush.bf16.msra.mxu0 %v742
        %796 = vmatpush.bf16.msra.mxu0 %v740
        %797 = vmatpush.bf16.msra.mxu0 %v738
        %798 = vmatmul.bf16.gmra.mxu0 %v664
        %v799 = vpop.f32.mrf.mxu0
        %v800 = vadd.f32 %v631, %v799
        %v801 = vpop.f32.mrf.mxu0
        %802 = vdwg.mxu0
        %803 = vmatpush.bf16.msra.mxu0 0
        %804 = vmatpush.bf16.msra.mxu0 0
        %805 = vmatpush.bf16.msra.mxu0 0
        %806 = vmatpush.bf16.msra.mxu0 0
        %807 = vmatpush.bf16.msra.mxu0 %v760
        %808 = vmatpush.bf16.msra.mxu0 %v758
        %809 = vmatpush.bf16.msra.mxu0 %v756
        %810 = vmatpush.bf16.msra.mxu0 %v754
        %811 = vmatmul.bf16.gmra.mxu0 %v788
        %v812 = vpop.f32.mrf.mxu0
        %v813 = vadd.f32 %v800, %v812
        %v814 = vpop.f32.mrf.mxu0
        %815 = vdwg.mxu0
        %816 = vmatpush.bf16.msra.mxu0 %v753
        %817 = vmatpush.bf16.msra.mxu0 %v751
        %818 = vmatpush.bf16.msra.mxu0 %v749
        %819 = vmatpush.bf16.msra.mxu0 %v747
        %820 = vmatpush.bf16.msra.mxu0 %v745
        %821 = vmatpush.bf16.msra.mxu0 %v743
        %822 = vmatpush.bf16.msra.mxu0 %v741
        %823 = vmatpush.bf16.msra.mxu0 %v739
        %824 = vmatmul.bf16.gmra.mxu0 %v664
        %v825 = vpop.f32.mrf.mxu0
        %v826 = vadd.f32 %v632, %v825
        %v827 = vpop.f32.mrf.mxu0
        %828 = vdwg.mxu0
        %829 = vmatpush.bf16.msra.mxu0 0
        %830 = vmatpush.bf16.msra.mxu0 0
        %831 = vmatpush.bf16.msra.mxu0 0
        %832 = vmatpush.bf16.msra.mxu0 0
        %833 = vmatpush.bf16.msra.mxu0 %v761
        %834 = vmatpush.bf16.msra.mxu0 %v759
        %835 = vmatpush.bf16.msra.mxu0 %v757
        %836 = vmatpush.bf16.msra.mxu0 %v755
        %837 = vmatmul.bf16.gmra.mxu0 %v788
        %v838 = vpop.f32.mrf.mxu0
        %v839 = vadd.f32 %v826, %v838
        %v840 = vpop.f32.mrf.mxu0
        %841 = vdwg.mxu0
        %v842 = vmul.f32 %v813, %v658
        %v843 = vmul.f32 %v839, %v659
        %v844 = vxor.u32 %v842, 2147483648
        %v845 = vxor.u32 %v843, 2147483648
        %v846 = vmul.f32 %v844, 1.442695
        %v847 = vpow.pop %v846
        %v848 = vmul.f32 %v845, 1.442695
        %v849 = vpow.pop %v848
        %v850 = vadd.f32 %v847, 1.0
        %v851 = vadd.f32 %v849, 1.0
        %v852 = vrcp.pop %v850
        %v853 = vmul.f32 %v850, %v852
        %v854 = vsub.f32 1.0, %v853
        %v855 = vmul.f32 %v852, %v854
        %v856 = vadd.f32 %v852, %v855
        %vm857 = vweird.f32 %v850
        %vm858 = vweird.f32 %v852
        %vm859 = vmor %vm857, %vm858
        %v860 = vsel %vm859, %v852, %v856
        %v861 = vand.u32 2147483647, %v850
        %vm862 = vcmp.eq.f32.partialorder %v861, 8.507059e+37
        %v863 = vand.u32 %v850, 2147483648
        %v864 = vor.u32 1.1754944e-38, %v863
        %v865 = vsel %vm862, %v864, %v860
        %v866 = vmul.f32 1.0, %v865
        %v867 = vrcp.pop %v851
        %v868 = vmul.f32 %v851, %v867
        %v869 = vsub.f32 1.0, %v868
        %v870 = vmul.f32 %v867, %v869
        %v871 = vadd.f32 %v867, %v870
        %vm872 = vweird.f32 %v851
        %vm873 = vweird.f32 %v867
        %vm874 = vmor %vm872, %vm873
        %v875 = vsel %vm874, %v867, %v871
        %v876 = vand.u32 2147483647, %v851
        %vm877 = vcmp.eq.f32.partialorder %v876, 8.507059e+37
        %v878 = vand.u32 %v851, 2147483648
        %v879 = vor.u32 1.1754944e-38, %v878
        %v880 = vsel %vm877, %v879, %v875
        %v881 = vmul.f32 1.0, %v880
        %v882 = vmul.f32 %v866, 2.0
        %v883 = vmul.f32 %v881, 2.0
        %v884 = vsub.f32 %v882, 1.0
        %v885 = vsub.f32 %v883, 1.0
        %v886 = vsel %vm656, %v884, %v866
        %v887 = vsel %vm657, %v885, %v881
        %889 = vrot.lane.b32.xlu0 %v661, 64
        %v890 = vpop.permute.xlu0 %889
        %v892 = vmul.f32 %v886, %v890
        %v893 = vmul.f32 %v886, %v887
        %895 = vrot.lane.b32.xlu0 %v893, 64
        %v896 = vpop.permute.xlu0 %895
        %v898 = vadd.f32 %v892, %v896
        %v899 = vtanh.pop %v898
        %v900 = vmul.f32 %v887, %v899
        %v901 = vpack.c.bf16 %v900, %v900
        %v902 = vpack.c.bf16 %v662, %v662
        %v904 = vunpack.c.l.b16 %v901
        %v905 = vpack.c.b16 %v904, %v904
        %906 = vrot.lane.b32.xlu0 %v905, 64
        %v907 = vpop.permute.xlu0 %906
        %v909 = vunpack.c.l.b16 %v902
        %v910 = vpack.c.b16 %v909, %v909
        %911 = vrot.lane.b32.xlu0 %v910, 64
        %v912 = vpop.permute.xlu0 %911
        %v915 = vsel %vm786, %v907, %v912
        %v933 = vunpack.c.l.b16 %v597
        %v934 = vunpack.c.h.b16 %v597
        %v935 = vunpack.c.l.b16 %v598
        %v936 = vunpack.c.h.b16 %v598
        %v937 = vunpack.c.l.b16 %v599
        %v938 = vunpack.c.h.b16 %v599
        %v939 = vunpack.c.l.b16 %v600
        %v940 = vunpack.c.h.b16 %v600
        %v941 = vunpack.c.l.b16 %v601
        %v942 = vunpack.c.h.b16 %v601
        %v943 = vunpack.c.l.b16 %v602
        %v944 = vunpack.c.h.b16 %v602
        %v945 = vunpack.c.l.b16 %v603
        %v946 = vunpack.c.h.b16 %v603
        %v947 = vunpack.c.l.b16 %v604
        %v948 = vunpack.c.h.b16 %v604
        %v949 = vunpack.c.l.b16 %v605
        %v950 = vunpack.c.h.b16 %v605
        %v951 = vunpack.c.l.b16 %v606
        %v952 = vunpack.c.h.b16 %v606
        %v953 = vunpack.c.l.b16 %v607
        %v954 = vunpack.c.h.b16 %v607
        %v955 = vunpack.c.l.b16 %v608
        %v956 = vunpack.c.h.b16 %v608
        %v957 = vunpack.c.l.b16 %v609
        %v958 = vunpack.c.h.b16 %v609
        %v959 = vunpack.c.l.b16 %v610
        %v960 = vunpack.c.h.b16 %v610
        %v961 = vunpack.c.l.b16 %v611
        %v962 = vunpack.c.h.b16 %v611
        %v963 = vunpack.c.l.b16 %v612
        %v964 = vunpack.c.h.b16 %v612
        %v965 = vpack.c.b16 %v935, %v933
        %v966 = vpack.c.b16 %v936, %v934
        %v967 = vpack.c.b16 %v939, %v937
        %v968 = vpack.c.b16 %v940, %v938
        %v969 = vpack.c.b16 %v943, %v941
        %v970 = vpack.c.b16 %v944, %v942
        %v971 = vpack.c.b16 %v947, %v945
        %v972 = vpack.c.b16 %v948, %v946
        %v973 = vpack.c.b16 %v951, %v949
        %v974 = vpack.c.b16 %v952, %v950
        %v975 = vpack.c.b16 %v955, %v953
        %v976 = vpack.c.b16 %v956, %v954
        %v977 = vpack.c.b16 %v959, %v957
        %v978 = vpack.c.b16 %v960, %v958
        %v979 = vpack.c.b16 %v963, %v961
        %v980 = vpack.c.b16 %v964, %v962
        %997 = vmatpush.bf16.msra.mxu0 %v979
        %998 = vmatpush.bf16.msra.mxu0 %v977
        %999 = vmatpush.bf16.msra.mxu0 %v975
        %1000 = vmatpush.bf16.msra.mxu0 %v973
        %1001 = vmatpush.bf16.msra.mxu0 %v971
        %1002 = vmatpush.bf16.msra.mxu0 %v969
        %1003 = vmatpush.bf16.msra.mxu0 %v967
        %1004 = vmatpush.bf16.msra.mxu0 %v965
        %1005 = vmatmul.bf16.gmra.mxu0 %v915
        %v1006 = vpop.f32.mrf.mxu0
        %v1007 = vadd.f32 %v637, %v1006
        %v1008 = vpop.f32.mrf.mxu0
        %1009 = vdwg.mxu0
        %1010 = vmatpush.bf16.msra.mxu0 %v980
        %1011 = vmatpush.bf16.msra.mxu0 %v978
        %1012 = vmatpush.bf16.msra.mxu0 %v976
        %1013 = vmatpush.bf16.msra.mxu0 %v974
        %1014 = vmatpush.bf16.msra.mxu0 %v972
        %1015 = vmatpush.bf16.msra.mxu0 %v970
        %1016 = vmatpush.bf16.msra.mxu0 %v968
        %1017 = vmatpush.bf16.msra.mxu0 %v966
        %1018 = vmatmul.bf16.gmra.mxu0 %v915
        %v1019 = vpop.f32.mrf.mxu0
        %v1020 = vadd.f32 %v638, %v1019
        %v1021 = vpop.f32.mrf.mxu0
        %1022 = vdwg.mxu0
        %v1023 = vmul.f32 %v1007, %v658
        %v1024 = vmul.f32 %v1020, %v659
        %v1025 = vxor.u32 %v1023, 2147483648
        %v1026 = vxor.u32 %v1024, 2147483648
        %v1027 = vmul.f32 %v1025, 1.442695
        %v1028 = vpow.pop %v1027
        %v1029 = vmul.f32 %v1026, 1.442695
        %v1030 = vpow.pop %v1029
        %v1031 = vadd.f32 %v1028, 1.0
        %v1032 = vadd.f32 %v1030, 1.0
        %v1033 = vrcp.pop %v1031
        %v1034 = vmul.f32 %v1031, %v1033
        %v1035 = vsub.f32 1.0, %v1034
        %v1036 = vmul.f32 %v1033, %v1035
        %v1037 = vadd.f32 %v1033, %v1036
        %vm1038 = vweird.f32 %v1031
        %vm1039 = vweird.f32 %v1033
        %vm1040 = vmor %vm1038, %vm1039
        %v1041 = vsel %vm1040, %v1033, %v1037
        %v1042 = vand.u32 2147483647, %v1031
        %vm1043 = vcmp.eq.f32.partialorder %v1042, 8.507059e+37
        %v1044 = vand.u32 %v1031, 2147483648
        %v1045 = vor.u32 1.1754944e-38, %v1044
        %v1046 = vsel %vm1043, %v1045, %v1041
        %v1047 = vmul.f32 1.0, %v1046
        %v1048 = vrcp.pop %v1032
        %v1049 = vmul.f32 %v1032, %v1048
        %v1050 = vsub.f32 1.0, %v1049
        %v1051 = vmul.f32 %v1048, %v1050
        %v1052 = vadd.f32 %v1048, %v1051
        %vm1053 = vweird.f32 %v1032
        %vm1054 = vweird.f32 %v1048
        %vm1055 = vmor %vm1053, %vm1054
        %v1056 = vsel %vm1055, %v1048, %v1052
        %v1057 = vand.u32 2147483647, %v1032
        %vm1058 = vcmp.eq.f32.partialorder %v1057, 8.507059e+37
        %v1059 = vand.u32 %v1032, 2147483648
        %v1060 = vor.u32 1.1754944e-38, %v1059
        %v1061 = vsel %vm1058, %v1060, %v1056
        %v1062 = vmul.f32 1.0, %v1061
        %v1063 = vmul.f32 %v1047, 2.0
        %v1064 = vmul.f32 %v1062, 2.0
        %v1065 = vsub.f32 %v1063, 1.0
        %v1066 = vsub.f32 %v1064, 1.0
        %v1067 = vsel %vm656, %v1065, %v1047
        %v1068 = vsel %vm657, %v1066, %v1062
        %1070 = vrot.lane.b32.xlu0 %v663, 64
        %v1071 = vpop.permute.xlu0 %1070
        %v1073 = vmul.f32 %v1067, %v1071
        %v1074 = vmul.f32 %v1067, %v1068
        %1076 = vrot.lane.b32.xlu0 %v1074, 64
        %v1077 = vpop.permute.xlu0 %1076
        %v1079 = vadd.f32 %v1073, %v1077
        %v1080 = vtanh.pop %v1079
        %v1081 = vmul.f32 %v1068, %v1080
        %v1082 = vpack.c.bf16 %v1081, %v1081
        %v1084 = vunpack.c.l.b16 %v1082
        %v1085 = vpack.c.b16 %v1084, %v1084
        %1086 = vrot.lane.b32.xlu0 %v1085, 64
        %v1087 = vpop.permute.xlu0 %1086
        %v1096 = vunpack.c.l.b16 %v613
        %v1097 = vunpack.c.l.b16 %v614
        %v1098 = vunpack.c.l.b16 %v615
        %v1099 = vunpack.c.l.b16 %v616
        %v1100 = vunpack.c.l.b16 %v617
        %v1101 = vunpack.c.l.b16 %v618
        %v1102 = vunpack.c.l.b16 %v619
        %v1103 = vunpack.c.l.b16 %v620
        %v1104 = vpack.c.b16 %v1097, %v1096
        %v1105 = vpack.c.b16 %v1099, %v1098
        %v1106 = vpack.c.b16 %v1101, %v1100
        %v1107 = vpack.c.b16 %v1103, %v1102
        %v1113 = vsel %vm786, %v1087, 0
        %1115 = vmatpush.bf16.msra.mxu0 0
        %1116 = vmatpush.bf16.msra.mxu0 0
        %1117 = vmatpush.bf16.msra.mxu0 0
        %1118 = vmatpush.bf16.msra.mxu0 0
        %1119 = vmatpush.bf16.msra.mxu0 %v1107
        %1120 = vmatpush.bf16.msra.mxu0 %v1106
        %1121 = vmatpush.bf16.msra.mxu0 %v1105
        %1122 = vmatpush.bf16.msra.mxu0 %v1104
        %1123 = vmatmul.bf16.gmra.mxu0 %v1113
        %v1124 = vpop.f32.mrf.mxu0
        %v1125 = vadd.f32 %v643, %v1124
        %v1126 = vpop.f32.mrf.mxu0
        %1127 = vdwg.mxu0
        %v1136 = vunpack.c.l.b16 %v621
        %v1137 = vunpack.c.l.b16 %v622
        %v1138 = vunpack.c.l.b16 %v623
        %v1139 = vunpack.c.l.b16 %v624
        %v1140 = vunpack.c.l.b16 %v625
        %v1141 = vunpack.c.l.b16 %v626
        %v1142 = vunpack.c.l.b16 %v627
        %v1143 = vunpack.c.l.b16 %v628
        %v1144 = vpack.c.b16 %v1137, %v1136
        %v1145 = vpack.c.b16 %v1139, %v1138
        %v1146 = vpack.c.b16 %v1141, %v1140
        %v1147 = vpack.c.b16 %v1143, %v1142
        %1152 = vmatpush.bf16.msra.mxu0 0
        %1153 = vmatpush.bf16.msra.mxu0 0
        %1154 = vmatpush.bf16.msra.mxu0 0
        %1155 = vmatpush.bf16.msra.mxu0 0
        %1156 = vmatpush.bf16.msra.mxu0 %v1147
        %1157 = vmatpush.bf16.msra.mxu0 %v1146
        %1158 = vmatpush.bf16.msra.mxu0 %v1145
        %1159 = vmatpush.bf16.msra.mxu0 %v1144
        %1160 = vmatmul.bf16.gmra.mxu0 %v1113
        %v1161 = vpop.f32.mrf.mxu0
        %v1162 = vadd.f32 %v647, %v1161
        %v1163 = vpop.f32.mrf.mxu0
        %1164 = vdwg.mxu0
        %v1165 = vsub.f32 %v1125, %v1162
        %v1166 = vmin.f32 %v1165, 0.0
        %v1167 = vand.u32 2147483647, %v1165
        %v1168 = vsub.f32 0.0, %v1167
        %v1169 = vmul.f32 %v1168, 1.442695
        %v1170 = vpow.pop %v1169
        %v1171 = vadd.f32 %v1170, 1.0
        %v1172 = vlog2.pop %v1171
        %v1173 = vmul.f32 %v1172, 0.6931472
        %v1174 = vsub.f32 %v1166, %v1173
        %1175 = vst [vmem:[%s550] sm:$0x3] %v1174
        %s1176 = scalar_lea.vmem %s481, 1 [#allocation6]
        %v1177 = vld [vmem:[%s1176] sm:$0x1]
        %v1178 = vsel %vm786, %v907, 0
        %1180 = vmatpush.bf16.msra.mxu0 %v752
        %1181 = vmatpush.bf16.msra.mxu0 %v750
        %1182 = vmatpush.bf16.msra.mxu0 %v748
        %1183 = vmatpush.bf16.msra.mxu0 %v746
        %1184 = vmatpush.bf16.msra.mxu0 %v744
        %1185 = vmatpush.bf16.msra.mxu0 %v742
        %1186 = vmatpush.bf16.msra.mxu0 %v740
        %1187 = vmatpush.bf16.msra.mxu0 %v738
        %1188 = vmatmul.bf16.gmra.mxu0 %v1177
        %v1189 = vpop.f32.mrf.mxu0
        %v1190 = vadd.f32 %v631, %v1189
        %v1191 = vpop.f32.mrf.mxu0
        %1192 = vdwg.mxu0
        %1193 = vmatpush.bf16.msra.mxu0 0
        %1194 = vmatpush.bf16.msra.mxu0 0
        %1195 = vmatpush.bf16.msra.mxu0 0
        %1196 = vmatpush.bf16.msra.mxu0 0
        %1197 = vmatpush.bf16.msra.mxu0 %v760
        %1198 = vmatpush.bf16.msra.mxu0 %v758
        %1199 = vmatpush.bf16.msra.mxu0 %v756
        %1200 = vmatpush.bf16.msra.mxu0 %v754
        %1201 = vmatmul.bf16.gmra.mxu0 %v1178
        %v1202 = vpop.f32.mrf.mxu0
        %v1203 = vadd.f32 %v1190, %v1202
        %v1204 = vpop.f32.mrf.mxu0
        %1205 = vdwg.mxu0
        %1206 = vmatpush.bf16.msra.mxu0 %v753
        %1207 = vmatpush.bf16.msra.mxu0 %v751
        %1208 = vmatpush.bf16.msra.mxu0 %v749
        %1209 = vmatpush.bf16.msra.mxu0 %v747
        %1210 = vmatpush.bf16.msra.mxu0 %v745
        %1211 = vmatpush.bf16.msra.mxu0 %v743
        %1212 = vmatpush.bf16.msra.mxu0 %v741
        %1213 = vmatpush.bf16.msra.mxu0 %v739
        %1214 = vmatmul.bf16.gmra.mxu0 %v1177
        %v1215 = vpop.f32.mrf.mxu0
        %v1216 = vadd.f32 %v632, %v1215
        %v1217 = vpop.f32.mrf.mxu0
        %1218 = vdwg.mxu0
        %1219 = vmatpush.bf16.msra.mxu0 0
        %1220 = vmatpush.bf16.msra.mxu0 0
        %1221 = vmatpush.bf16.msra.mxu0 0
        %1222 = vmatpush.bf16.msra.mxu0 0
        %1223 = vmatpush.bf16.msra.mxu0 %v761
        %1224 = vmatpush.bf16.msra.mxu0 %v759
        %1225 = vmatpush.bf16.msra.mxu0 %v757
        %1226 = vmatpush.bf16.msra.mxu0 %v755
        %1227 = vmatmul.bf16.gmra.mxu0 %v1178
        %v1228 = vpop.f32.mrf.mxu0
        %v1229 = vadd.f32 %v1216, %v1228
        %v1230 = vpop.f32.mrf.mxu0
        %1231 = vdwg.mxu0
        %v1232 = vmul.f32 %v1203, %v658
        %v1233 = vmul.f32 %v1229, %v659
        %v1234 = vxor.u32 %v1232, 2147483648
        %v1235 = vxor.u32 %v1233, 2147483648
        %v1236 = vmul.f32 %v1234, 1.442695
        %v1237 = vpow.pop %v1236
        %v1238 = vmul.f32 %v1235, 1.442695
        %v1239 = vpow.pop %v1238
        %v1240 = vadd.f32 %v1237, 1.0
        %v1241 = vadd.f32 %v1239, 1.0
        %v1242 = vrcp.pop %v1240
        %v1243 = vmul.f32 %v1240, %v1242
        %v1244 = vsub.f32 1.0, %v1243
        %v1245 = vmul.f32 %v1242, %v1244
        %v1246 = vadd.f32 %v1242, %v1245
        %vm1247 = vweird.f32 %v1240
        %vm1248 = vweird.f32 %v1242
        %vm1249 = vmor %vm1247, %vm1248
        %v1250 = vsel %vm1249, %v1242, %v1246
        %v1251 = vand.u32 2147483647, %v1240
        %vm1252 = vcmp.eq.f32.partialorder %v1251, 8.507059e+37
        %v1253 = vand.u32 %v1240, 2147483648
        %v1254 = vor.u32 1.1754944e-38, %v1253
        %v1255 = vsel %vm1252, %v1254, %v1250
        %v1256 = vmul.f32 1.0, %v1255
        %v1257 = vrcp.pop %v1241
        %v1258 = vmul.f32 %v1241, %v1257
        %v1259 = vsub.f32 1.0, %v1258
        %v1260 = vmul.f32 %v1257, %v1259
        %v1261 = vadd.f32 %v1257, %v1260
        %vm1262 = vweird.f32 %v1241
        %vm1263 = vweird.f32 %v1257
        %vm1264 = vmor %vm1262, %vm1263
        %v1265 = vsel %vm1264, %v1257, %v1261
        %v1266 = vand.u32 2147483647, %v1241
        %vm1267 = vcmp.eq.f32.partialorder %v1266, 8.507059e+37
        %v1268 = vand.u32 %v1241, 2147483648
        %v1269 = vor.u32 1.1754944e-38, %v1268
        %v1270 = vsel %vm1267, %v1269, %v1265
        %v1271 = vmul.f32 1.0, %v1270
        %v1272 = vmul.f32 %v1256, 2.0
        %v1273 = vmul.f32 %v1271, 2.0
        %v1274 = vsub.f32 %v1272, 1.0
        %v1275 = vsub.f32 %v1273, 1.0
        %v1276 = vsel %vm656, %v1274, %v1256
        %v1277 = vsel %vm657, %v1275, %v1271
        %v1278 = vmul.f32 %v1276, %v898
        %v1279 = vmul.f32 %v1276, %v1277
        %1281 = vrot.lane.b32.xlu0 %v1279, 64
        %v1282 = vpop.permute.xlu0 %1281
        %v1284 = vadd.f32 %v1278, %v1282
        %v1285 = vtanh.pop %v1284
        %v1286 = vmul.f32 %v1277, %v1285
        %v1287 = vpack.c.bf16 %v1286, %v1286
        %v1289 = vunpack.c.l.b16 %v1287
        %v1290 = vpack.c.b16 %v1289, %v1289
        %1291 = vrot.lane.b32.xlu0 %v1290, 64
        %v1292 = vpop.permute.xlu0 %1291
        %v1295 = vsel %vm786, %v1292, %v1082
        %1297 = vmatpush.bf16.msra.mxu0 %v979
        %1298 = vmatpush.bf16.msra.mxu0 %v977
        %1299 = vmatpush.bf16.msra.mxu0 %v975
        %1300 = vmatpush.bf16.msra.mxu0 %v973
        %1301 = vmatpush.bf16.msra.mxu0 %v971
        %1302 = vmatpush.bf16.msra.mxu0 %v969
        %1303 = vmatpush.bf16.msra.mxu0 %v967
        %1304 = vmatpush.bf16.msra.mxu0 %v965
        %1305 = vmatmul.bf16.gmra.mxu0 %v1295
        %v1306 = vpop.f32.mrf.mxu0
        %v1307 = vadd.f32 %v637, %v1306
        %v1308 = vpop.f32.mrf.mxu0
        %1309 = vdwg.mxu0
        %1310 = vmatpush.bf16.msra.mxu0 %v980
        %1311 = vmatpush.bf16.msra.mxu0 %v978
        %1312 = vmatpush.bf16.msra.mxu0 %v976
        %1313 = vmatpush.bf16.msra.mxu0 %v974
        %1314 = vmatpush.bf16.msra.mxu0 %v972
        %1315 = vmatpush.bf16.msra.mxu0 %v970
        %1316 = vmatpush.bf16.msra.mxu0 %v968
        %1317 = vmatpush.bf16.msra.mxu0 %v966
        %1318 = vmatmul.bf16.gmra.mxu0 %v1295
        %v1319 = vpop.f32.mrf.mxu0
        %v1320 = vadd.f32 %v638, %v1319
        %v1321 = vpop.f32.mrf.mxu0
        %1322 = vdwg.mxu0
        %v1323 = vmul.f32 %v1307, %v658
        %v1324 = vmul.f32 %v1320, %v659
        %v1325 = vxor.u32 %v1323, 2147483648
        %v1326 = vxor.u32 %v1324, 2147483648
        %v1327 = vmul.f32 %v1325, 1.442695
        %v1328 = vpow.pop %v1327
        %v1329 = vmul.f32 %v1326, 1.442695
        %v1330 = vpow.pop %v1329
        %v1331 = vadd.f32 %v1328, 1.0
        %v1332 = vadd.f32 %v1330, 1.0
        %v1333 = vrcp.pop %v1331
        %v1334 = vmul.f32 %v1331, %v1333
        %v1335 = vsub.f32 1.0, %v1334
        %v1336 = vmul.f32 %v1333, %v1335
        %v1337 = vadd.f32 %v1333, %v1336
        %vm1338 = vweird.f32 %v1331
        %vm1339 = vweird.f32 %v1333
        %vm1340 = vmor %vm1338, %vm1339
        %v1341 = vsel %vm1340, %v1333, %v1337
        %v1342 = vand.u32 2147483647, %v1331
        %vm1343 = vcmp.eq.f32.partialorder %v1342, 8.507059e+37
        %v1344 = vand.u32 %v1331, 2147483648
        %v1345 = vor.u32 1.1754944e-38, %v1344
        %v1346 = vsel %vm1343, %v1345, %v1341
        %v1347 = vmul.f32 1.0, %v1346
        %v1348 = vrcp.pop %v1332
        %v1349 = vmul.f32 %v1332, %v1348
        %v1350 = vsub.f32 1.0, %v1349
        %v1351 = vmul.f32 %v1348, %v1350
        %v1352 = vadd.f32 %v1348, %v1351
        %vm1353 = vweird.f32 %v1332
        %vm1354 = vweird.f32 %v1348
        %vm1355 = vmor %vm1353, %vm1354
        %v1356 = vsel %vm1355, %v1348, %v1352
        %v1357 = vand.u32 2147483647, %v1332
        %vm1358 = vcmp.eq.f32.partialorder %v1357, 8.507059e+37
        %v1359 = vand.u32 %v1332, 2147483648
        %v1360 = vor.u32 1.1754944e-38, %v1359
        %v1361 = vsel %vm1358, %v1360, %v1356
        %v1362 = vmul.f32 1.0, %v1361
        %v1363 = vmul.f32 %v1347, 2.0
        %v1364 = vmul.f32 %v1362, 2.0
        %v1365 = vsub.f32 %v1363, 1.0
        %v1366 = vsub.f32 %v1364, 1.0
        %v1367 = vsel %vm656, %v1365, %v1347
        %v1368 = vsel %vm657, %v1366, %v1362
        %v1369 = vmul.f32 %v1367, %v1079
        %v1370 = vmul.f32 %v1367, %v1368
        %1372 = vrot.lane.b32.xlu0 %v1370, 64
        %v1373 = vpop.permute.xlu0 %1372
        %v1375 = vadd.f32 %v1369, %v1373
        %v1376 = vtanh.pop %v1375
        %v1377 = vmul.f32 %v1368, %v1376
        %v1378 = vpack.c.bf16 %v1377, %v1377
        %v1380 = vunpack.c.l.b16 %v1378
        %v1381 = vpack.c.b16 %v1380, %v1380
        %1382 = vrot.lane.b32.xlu0 %v1381, 64
        %v1383 = vpop.permute.xlu0 %1382
        %v1385 = vsel %vm786, %v1383, 0
        %1387 = vmatpush.bf16.msra.mxu0 0
        %1388 = vmatpush.bf16.msra.mxu0 0
        %1389 = vmatpush.bf16.msra.mxu0 0
        %1390 = vmatpush.bf16.msra.mxu0 0
        %1391 = vmatpush.bf16.msra.mxu0 %v1107
        %1392 = vmatpush.bf16.msra.mxu0 %v1106
        %1393 = vmatpush.bf16.msra.mxu0 %v1105
        %1394 = vmatpush.bf16.msra.mxu0 %v1104
        %1395 = vmatmul.bf16.gmra.mxu0 %v1385
        %v1396 = vpop.f32.mrf.mxu0
        %v1397 = vadd.f32 %v643, %v1396
        %v1398 = vpop.f32.mrf.mxu0
        %1399 = vdwg.mxu0
        %1400 = vmatpush.bf16.msra.mxu0 0
        %1401 = vmatpush.bf16.msra.mxu0 0
        %1402 = vmatpush.bf16.msra.mxu0 0
        %1403 = vmatpush.bf16.msra.mxu0 0
        %1404 = vmatpush.bf16.msra.mxu0 %v1147
        %1405 = vmatpush.bf16.msra.mxu0 %v1146
        %1406 = vmatpush.bf16.msra.mxu0 %v1145
        %1407 = vmatpush.bf16.msra.mxu0 %v1144
        %1408 = vmatmul.bf16.gmra.mxu0 %v1385
        %v1409 = vpop.f32.mrf.mxu0
        %v1410 = vadd.f32 %v647, %v1409
        %v1411 = vpop.f32.mrf.mxu0
        %1412 = vdwg.mxu0
        %v1413 = vsub.f32 %v1397, %v1410
        %v1414 = vmin.f32 %v1413, 0.0
        %v1415 = vand.u32 2147483647, %v1413
        %v1416 = vsub.f32 0.0, %v1415
        %v1417 = vmul.f32 %v1416, 1.442695
        %v1418 = vpow.pop %v1417
        %v1419 = vadd.f32 %v1418, 1.0
        %v1420 = vlog2.pop %v1419
        %v1421 = vmul.f32 %v1420, 0.6931472
        %v1422 = vsub.f32 %v1414, %v1421
        %s1423 = scalar_lea.vmem %s550, 2 [#allocation18]
        %1424 = vst [vmem:[%s1423] sm:$0x3] %v1422
        %s1425 = scalar_lea.vmem %s481, 2 [#allocation6]
        %v1426 = vld [vmem:[%s1425] sm:$0x1]
        %v1427 = vsel %vm786, %v1292, 0
        %1429 = vmatpush.bf16.msra.mxu0 %v752
        %1430 = vmatpush.bf16.msra.mxu0 %v750
        %1431 = vmatpush.bf16.msra.mxu0 %v748
        %1432 = vmatpush.bf16.msra.mxu0 %v746
        %1433 = vmatpush.bf16.msra.mxu0 %v744
        %1434 = vmatpush.bf16.msra.mxu0 %v742
        %1435 = vmatpush.bf16.msra.mxu0 %v740
        %1436 = vmatpush.bf16.msra.mxu0 %v738
        %1437 = vmatmul.bf16.gmra.mxu0 %v1426
        %v1438 = vpop.f32.mrf.mxu0
        %v1439 = vadd.f32 %v631, %v1438
        %v1440 = vpop.f32.mrf.mxu0
        %1441 = vdwg.mxu0
        %1442 = vmatpush.bf16.msra.mxu0 0
        %1443 = vmatpush.bf16.msra.mxu0 0
        %1444 = vmatpush.bf16.msra.mxu0 0
        %1445 = vmatpush.bf16.msra.mxu0 0
        %1446 = vmatpush.bf16.msra.mxu0 %v760
        %1447 = vmatpush.bf16.msra.mxu0 %v758
        %1448 = vmatpush.bf16.msra.mxu0 %v756
        %1449 = vmatpush.bf16.msra.mxu0 %v754
        %1450 = vmatmul.bf16.gmra.mxu0 %v1427
        %v1451 = vpop.f32.mrf.mxu0
        %v1452 = vadd.f32 %v1439, %v1451
        %v1453 = vpop.f32.mrf.mxu0
        %1454 = vdwg.mxu0
        %1455 = vmatpush.bf16.msra.mxu0 %v753
        %1456 = vmatpush.bf16.msra.mxu0 %v751
        %1457 = vmatpush.bf16.msra.mxu0 %v749
        %1458 = vmatpush.bf16.msra.mxu0 %v747
        %1459 = vmatpush.bf16.msra.mxu0 %v745
        %1460 = vmatpush.bf16.msra.mxu0 %v743
        %1461 = vmatpush.bf16.msra.mxu0 %v741
        %1462 = vmatpush.bf16.msra.mxu0 %v739
        %1463 = vmatmul.bf16.gmra.mxu0 %v1426
        %v1464 = vpop.f32.mrf.mxu0
        %v1465 = vadd.f32 %v632, %v1464
        %v1466 = vpop.f32.mrf.mxu0
        %1467 = vdwg.mxu0
        %1468 = vmatpush.bf16.msra.mxu0 0
        %1469 = vmatpush.bf16.msra.mxu0 0
        %1470 = vmatpush.bf16.msra.mxu0 0
        %1471 = vmatpush.bf16.msra.mxu0 0
        %1472 = vmatpush.bf16.msra.mxu0 %v761
        %1473 = vmatpush.bf16.msra.mxu0 %v759
        %1474 = vmatpush.bf16.msra.mxu0 %v757
        %1475 = vmatpush.bf16.msra.mxu0 %v755
        %1476 = vmatmul.bf16.gmra.mxu0 %v1427
        %v1477 = vpop.f32.mrf.mxu0
        %v1478 = vadd.f32 %v1465, %v1477
        %v1479 = vpop.f32.mrf.mxu0
        %1480 = vdwg.mxu0
        %v1481 = vmul.f32 %v1452, %v658
        %v1482 = vmul.f32 %v1478, %v659
        %v1483 = vxor.u32 %v1481, 2147483648
        %v1484 = vxor.u32 %v1482, 2147483648
        %v1485 = vmul.f32 %v1483, 1.442695
        %v1486 = vpow.pop %v1485
        %v1487 = vmul.f32 %v1484, 1.442695
        %v1488 = vpow.pop %v1487
        %v1489 = vadd.f32 %v1486, 1.0
        %v1490 = vadd.f32 %v1488, 1.0
        %v1491 = vrcp.pop %v1489
        %v1492 = vmul.f32 %v1489, %v1491
        %v1493 = vsub.f32 1.0, %v1492
        %v1494 = vmul.f32 %v1491, %v1493
        %v1495 = vadd.f32 %v1491, %v1494
        %vm1496 = vweird.f32 %v1489
        %vm1497 = vweird.f32 %v1491
        %vm1498 = vmor %vm1496, %vm1497
        %v1499 = vsel %vm1498, %v1491, %v1495
        %v1500 = vand.u32 2147483647, %v1489
        %vm1501 = vcmp.eq.f32.partialorder %v1500, 8.507059e+37
        %v1502 = vand.u32 %v1489, 2147483648
        %v1503 = vor.u32 1.1754944e-38, %v1502
        %v1504 = vsel %vm1501, %v1503, %v1499
        %v1505 = vmul.f32 1.0, %v1504
        %v1506 = vrcp.pop %v1490
        %v1507 = vmul.f32 %v1490, %v1506
        %v1508 = vsub.f32 1.0, %v1507
        %v1509 = vmul.f32 %v1506, %v1508
        %v1510 = vadd.f32 %v1506, %v1509
        %vm1511 = vweird.f32 %v1490
        %vm1512 = vweird.f32 %v1506
        %vm1513 = vmor %vm1511, %vm1512
        %v1514 = vsel %vm1513, %v1506, %v1510
        %v1515 = vand.u32 2147483647, %v1490
        %vm1516 = vcmp.eq.f32.partialorder %v1515, 8.507059e+37
        %v1517 = vand.u32 %v1490, 2147483648
        %v1518 = vor.u32 1.1754944e-38, %v1517
        %v1519 = vsel %vm1516, %v1518, %v1514
        %v1520 = vmul.f32 1.0, %v1519
        %v1521 = vmul.f32 %v1505, 2.0
        %v1522 = vmul.f32 %v1520, 2.0
        %v1523 = vsub.f32 %v1521, 1.0
        %v1524 = vsub.f32 %v1522, 1.0
        %v1525 = vsel %vm656, %v1523, %v1505
        %v1526 = vsel %vm657, %v1524, %v1520
        %v1527 = vmul.f32 %v1525, %v1284
        %v1528 = vmul.f32 %v1525, %v1526
        %1530 = vrot.lane.b32.xlu0 %v1528, 64
        %v1531 = vpop.permute.xlu0 %1530
        %v1533 = vadd.f32 %v1527, %v1531
        %v1534 = vtanh.pop %v1533
        %v1535 = vmul.f32 %v1526, %v1534
        %v1536 = vpack.c.bf16 %v1535, %v1535
        %v1538 = vunpack.c.l.b16 %v1536
        %v1539 = vpack.c.b16 %v1538, %v1538
        %1540 = vrot.lane.b32.xlu0 %v1539, 64
        %v1541 = vpop.permute.xlu0 %1540
        %v1544 = vsel %vm786, %v1541, %v1378
        %1546 = vmatpush.bf16.msra.mxu0 %v979
        %1547 = vmatpush.bf16.msra.mxu0 %v977
        %1548 = vmatpush.bf16.msra.mxu0 %v975
        %1549 = vmatpush.bf16.msra.mxu0 %v973
        %1550 = vmatpush.bf16.msra.mxu0 %v971
        %1551 = vmatpush.bf16.msra.mxu0 %v969
        %1552 = vmatpush.bf16.msra.mxu0 %v967
        %1553 = vmatpush.bf16.msra.mxu0 %v965
        %1554 = vmatmul.bf16.gmra.mxu0 %v1544
        %v1555 = vpop.f32.mrf.mxu0
        %v1556 = vadd.f32 %v637, %v1555
        %v1557 = vpop.f32.mrf.mxu0
        %1558 = vdwg.mxu0
        %1559 = vmatpush.bf16.msra.mxu0 %v980
        %1560 = vmatpush.bf16.msra.mxu0 %v978
        %1561 = vmatpush.bf16.msra.mxu0 %v976
        %1562 = vmatpush.bf16.msra.mxu0 %v974
        %1563 = vmatpush.bf16.msra.mxu0 %v972
        %1564 = vmatpush.bf16.msra.mxu0 %v970
        %1565 = vmatpush.bf16.msra.mxu0 %v968
        %1566 = vmatpush.bf16.msra.mxu0 %v966
        %1567 = vmatmul.bf16.gmra.mxu0 %v1544
        %v1568 = vpop.f32.mrf.mxu0
        %v1569 = vadd.f32 %v638, %v1568
        %v1570 = vpop.f32.mrf.mxu0
        %1571 = vdwg.mxu0
        %v1572 = vmul.f32 %v1556, %v658
        %v1573 = vmul.f32 %v1569, %v659
        %v1574 = vxor.u32 %v1572, 2147483648
        %v1575 = vxor.u32 %v1573, 2147483648
        %v1576 = vmul.f32 %v1574, 1.442695
        %v1577 = vpow.pop %v1576
        %v1578 = vmul.f32 %v1575, 1.442695
        %v1579 = vpow.pop %v1578
        %v1580 = vadd.f32 %v1577, 1.0
        %v1581 = vadd.f32 %v1579, 1.0
        %v1582 = vrcp.pop %v1580
        %v1583 = vmul.f32 %v1580, %v1582
        %v1584 = vsub.f32 1.0, %v1583
        %v1585 = vmul.f32 %v1582, %v1584
        %v1586 = vadd.f32 %v1582, %v1585
        %vm1587 = vweird.f32 %v1580
        %vm1588 = vweird.f32 %v1582
        %vm1589 = vmor %vm1587, %vm1588
        %v1590 = vsel %vm1589, %v1582, %v1586
        %v1591 = vand.u32 2147483647, %v1580
        %vm1592 = vcmp.eq.f32.partialorder %v1591, 8.507059e+37
        %v1593 = vand.u32 %v1580, 2147483648
        %v1594 = vor.u32 1.1754944e-38, %v1593
        %v1595 = vsel %vm1592, %v1594, %v1590
        %v1596 = vmul.f32 1.0, %v1595
        %v1597 = vrcp.pop %v1581
        %v1598 = vmul.f32 %v1581, %v1597
        %v1599 = vsub.f32 1.0, %v1598
        %v1600 = vmul.f32 %v1597, %v1599
        %v1601 = vadd.f32 %v1597, %v1600
        %vm1602 = vweird.f32 %v1581
        %vm1603 = vweird.f32 %v1597
        %vm1604 = vmor %vm1602, %vm1603
        %v1605 = vsel %vm1604, %v1597, %v1601
        %v1606 = vand.u32 2147483647, %v1581
        %vm1607 = vcmp.eq.f32.partialorder %v1606, 8.507059e+37
        %v1608 = vand.u32 %v1581, 2147483648
        %v1609 = vor.u32 1.1754944e-38, %v1608
        %v1610 = vsel %vm1607, %v1609, %v1605
        %v1611 = vmul.f32 1.0, %v1610
        %v1612 = vmul.f32 %v1596, 2.0
        %v1613 = vmul.f32 %v1611, 2.0
        %v1614 = vsub.f32 %v1612, 1.0
        %v1615 = vsub.f32 %v1613, 1.0
        %v1616 = vsel %vm656, %v1614, %v1596
        %v1617 = vsel %vm657, %v1615, %v1611
        %v1618 = vmul.f32 %v1616, %v1375
        %v1619 = vmul.f32 %v1616, %v1617
        %1621 = vrot.lane.b32.xlu0 %v1619, 64
        %v1622 = vpop.permute.xlu0 %1621
        %v1624 = vadd.f32 %v1618, %v1622
        %v1625 = vtanh.pop %v1624
        %v1626 = vmul.f32 %v1617, %v1625
        %v1627 = vpack.c.bf16 %v1626, %v1626
        %v1629 = vunpack.c.l.b16 %v1627
        %v1630 = vpack.c.b16 %v1629, %v1629
        %1631 = vrot.lane.b32.xlu0 %v1630, 64
        %v1632 = vpop.permute.xlu0 %1631
        %v1634 = vsel %vm786, %v1632, 0
        %1636 = vmatpush.bf16.msra.mxu0 0
        %1637 = vmatpush.bf16.msra.mxu0 0
        %1638 = vmatpush.bf16.msra.mxu0 0
        %1639 = vmatpush.bf16.msra.mxu0 0
        %1640 = vmatpush.bf16.msra.mxu0 %v1107
        %1641 = vmatpush.bf16.msra.mxu0 %v1106
        %1642 = vmatpush.bf16.msra.mxu0 %v1105
        %1643 = vmatpush.bf16.msra.mxu0 %v1104
        %1644 = vmatmul.bf16.gmra.mxu0 %v1634
        %v1645 = vpop.f32.mrf.mxu0
        %v1646 = vadd.f32 %v643, %v1645
        %v1647 = vpop.f32.mrf.mxu0
        %1648 = vdwg.mxu0
        %1649 = vmatpush.bf16.msra.mxu0 0
        %1650 = vmatpush.bf16.msra.mxu0 0
        %1651 = vmatpush.bf16.msra.mxu0 0
        %1652 = vmatpush.bf16.msra.mxu0 0
        %1653 = vmatpush.bf16.msra.mxu0 %v1147
        %1654 = vmatpush.bf16.msra.mxu0 %v1146
        %1655 = vmatpush.bf16.msra.mxu0 %v1145
        %1656 = vmatpush.bf16.msra.mxu0 %v1144
        %1657 = vmatmul.bf16.gmra.mxu0 %v1634
        %v1658 = vpop.f32.mrf.mxu0
        %v1659 = vadd.f32 %v647, %v1658
        %v1660 = vpop.f32.mrf.mxu0
        %1661 = vdwg.mxu0
        %v1662 = vsub.f32 %v1646, %v1659
        %v1663 = vmin.f32 %v1662, 0.0
        %v1664 = vand.u32 2147483647, %v1662
        %v1665 = vsub.f32 0.0, %v1664
        %v1666 = vmul.f32 %v1665, 1.442695
        %v1667 = vpow.pop %v1666
        %v1668 = vadd.f32 %v1667, 1.0
        %v1669 = vlog2.pop %v1668
        %v1670 = vmul.f32 %v1669, 0.6931472
        %v1671 = vsub.f32 %v1663, %v1670
        %s1672 = scalar_lea.vmem %s550, 4 [#allocation18]
        %1673 = vst [vmem:[%s1672] sm:$0x3] %v1671
        %s1674 = scalar_lea.vmem %s481, 3 [#allocation6]
        %v1675 = vld [vmem:[%s1674] sm:$0x1]
        %v1676 = vsel %vm786, %v1541, 0
        %1678 = vmatpush.bf16.msra.mxu0 %v752
        %1679 = vmatpush.bf16.msra.mxu0 %v750
        %1680 = vmatpush.bf16.msra.mxu0 %v748
        %1681 = vmatpush.bf16.msra.mxu0 %v746
        %1682 = vmatpush.bf16.msra.mxu0 %v744
        %1683 = vmatpush.bf16.msra.mxu0 %v742
        %1684 = vmatpush.bf16.msra.mxu0 %v740
        %1685 = vmatpush.bf16.msra.mxu0 %v738
        %1686 = vmatmul.bf16.gmra.mxu0 %v1675
        %v1687 = vpop.f32.mrf.mxu0
        %v1688 = vadd.f32 %v631, %v1687
        %v1689 = vpop.f32.mrf.mxu0
        %1690 = vdwg.mxu0
        %1691 = vmatpush.bf16.msra.mxu0 0
        %1692 = vmatpush.bf16.msra.mxu0 0
        %1693 = vmatpush.bf16.msra.mxu0 0
        %1694 = vmatpush.bf16.msra.mxu0 0
        %1695 = vmatpush.bf16.msra.mxu0 %v760
        %1696 = vmatpush.bf16.msra.mxu0 %v758
        %1697 = vmatpush.bf16.msra.mxu0 %v756
        %1698 = vmatpush.bf16.msra.mxu0 %v754
        %1699 = vmatmul.bf16.gmra.mxu0 %v1676
        %v1700 = vpop.f32.mrf.mxu0
        %v1701 = vadd.f32 %v1688, %v1700
        %v1702 = vpop.f32.mrf.mxu0
        %1703 = vdwg.mxu0
        %1704 = vmatpush.bf16.msra.mxu0 %v753
        %1705 = vmatpush.bf16.msra.mxu0 %v751
        %1706 = vmatpush.bf16.msra.mxu0 %v749
        %1707 = vmatpush.bf16.msra.mxu0 %v747
        %1708 = vmatpush.bf16.msra.mxu0 %v745
        %1709 = vmatpush.bf16.msra.mxu0 %v743
        %1710 = vmatpush.bf16.msra.mxu0 %v741
        %1711 = vmatpush.bf16.msra.mxu0 %v739
        %1712 = vmatmul.bf16.gmra.mxu0 %v1675
        %v1713 = vpop.f32.mrf.mxu0
        %v1714 = vadd.f32 %v632, %v1713
        %v1715 = vpop.f32.mrf.mxu0
        %1716 = vdwg.mxu0
        %1717 = vmatpush.bf16.msra.mxu0 0
        %1718 = vmatpush.bf16.msra.mxu0 0
        %1719 = vmatpush.bf16.msra.mxu0 0
        %1720 = vmatpush.bf16.msra.mxu0 0
        %1721 = vmatpush.bf16.msra.mxu0 %v761
        %1722 = vmatpush.bf16.msra.mxu0 %v759
        %1723 = vmatpush.bf16.msra.mxu0 %v757
        %1724 = vmatpush.bf16.msra.mxu0 %v755
        %1725 = vmatmul.bf16.gmra.mxu0 %v1676
        %v1726 = vpop.f32.mrf.mxu0
        %v1727 = vadd.f32 %v1714, %v1726
        %v1728 = vpop.f32.mrf.mxu0
        %1729 = vdwg.mxu0
        %v1730 = vmul.f32 %v1701, %v658
        %v1731 = vmul.f32 %v1727, %v659
        %v1732 = vxor.u32 %v1730, 2147483648
        %v1733 = vxor.u32 %v1731, 2147483648
        %v1734 = vmul.f32 %v1732, 1.442695
        %v1735 = vpow.pop %v1734
        %v1736 = vmul.f32 %v1733, 1.442695
        %v1737 = vpow.pop %v1736
        %v1738 = vadd.f32 %v1735, 1.0
        %v1739 = vadd.f32 %v1737, 1.0
        %v1740 = vrcp.pop %v1738
        %v1741 = vmul.f32 %v1738, %v1740
        %v1742 = vsub.f32 1.0, %v1741
        %v1743 = vmul.f32 %v1740, %v1742
        %v1744 = vadd.f32 %v1740, %v1743
        %vm1745 = vweird.f32 %v1738
        %vm1746 = vweird.f32 %v1740
        %vm1747 = vmor %vm1745, %vm1746
        %v1748 = vsel %vm1747, %v1740, %v1744
        %v1749 = vand.u32 2147483647, %v1738
        %vm1750 = vcmp.eq.f32.partialorder %v1749, 8.507059e+37
        %v1751 = vand.u32 %v1738, 2147483648
        %v1752 = vor.u32 1.1754944e-38, %v1751
        %v1753 = vsel %vm1750, %v1752, %v1748
        %v1754 = vmul.f32 1.0, %v1753
        %v1755 = vrcp.pop %v1739
        %v1756 = vmul.f32 %v1739, %v1755
        %v1757 = vsub.f32 1.0, %v1756
        %v1758 = vmul.f32 %v1755, %v1757
        %v1759 = vadd.f32 %v1755, %v1758
        %vm1760 = vweird.f32 %v1739
        %vm1761 = vweird.f32 %v1755
        %vm1762 = vmor %vm1760, %vm1761
        %v1763 = vsel %vm1762, %v1755, %v1759
        %v1764 = vand.u32 2147483647, %v1739
        %vm1765 = vcmp.eq.f32.partialorder %v1764, 8.507059e+37
        %v1766 = vand.u32 %v1739, 2147483648
        %v1767 = vor.u32 1.1754944e-38, %v1766
        %v1768 = vsel %vm1765, %v1767, %v1763
        %v1769 = vmul.f32 1.0, %v1768
        %v1770 = vmul.f32 %v1754, 2.0
        %v1771 = vmul.f32 %v1769, 2.0
        %v1772 = vsub.f32 %v1770, 1.0
        %v1773 = vsub.f32 %v1771, 1.0
        %v1774 = vsel %vm656, %v1772, %v1754
        %v1775 = vsel %vm657, %v1773, %v1769
        %v1776 = vmul.f32 %v1774, %v1533
        %v1777 = vmul.f32 %v1774, %v1775
        %1779 = vrot.lane.b32.xlu0 %v1777, 64
        %v1780 = vpop.permute.xlu0 %1779
        %v1782 = vadd.f32 %v1776, %v1780
        %v1783 = vtanh.pop %v1782
        %v1784 = vmul.f32 %v1775, %v1783
        %v1785 = vpack.c.bf16 %v1784, %v1784
        %v1787 = vunpack.c.l.b16 %v1785
        %v1788 = vpack.c.b16 %v1787, %v1787
        %1789 = vrot.lane.b32.xlu0 %v1788, 64
        %v1790 = vpop.permute.xlu0 %1789
        %v1793 = vsel %vm786, %v1790, %v1627
        %1795 = vmatpush.bf16.msra.mxu0 %v979
        %1796 = vmatpush.bf16.msra.mxu0 %v977
        %1797 = vmatpush.bf16.msra.mxu0 %v975
        %1798 = vmatpush.bf16.msra.mxu0 %v973
        %1799 = vmatpush.bf16.msra.mxu0 %v971
        %1800 = vmatpush.bf16.msra.mxu0 %v969
        %1801 = vmatpush.bf16.msra.mxu0 %v967
        %1802 = vmatpush.bf16.msra.mxu0 %v965
        %1803 = vmatmul.bf16.gmra.mxu0 %v1793
        %v1804 = vpop.f32.mrf.mxu0
        %v1805 = vadd.f32 %v637, %v1804
        %v1806 = vpop.f32.mrf.mxu0
        %1807 = vdwg.mxu0
        %1808 = vmatpush.bf16.msra.mxu0 %v980
        %1809 = vmatpush.bf16.msra.mxu0 %v978
        %1810 = vmatpush.bf16.msra.mxu0 %v976
        %1811 = vmatpush.bf16.msra.mxu0 %v974
        %1812 = vmatpush.bf16.msra.mxu0 %v972
        %1813 = vmatpush.bf16.msra.mxu0 %v970
        %1814 = vmatpush.bf16.msra.mxu0 %v968
        %1815 = vmatpush.bf16.msra.mxu0 %v966
        %1816 = vmatmul.bf16.gmra.mxu0 %v1793
        %v1817 = vpop.f32.mrf.mxu0
        %v1818 = vadd.f32 %v638, %v1817
        %v1819 = vpop.f32.mrf.mxu0
        %1820 = vdwg.mxu0
        %v1821 = vmul.f32 %v1805, %v658
        %v1822 = vmul.f32 %v1818, %v659
        %v1823 = vxor.u32 %v1821, 2147483648
        %v1824 = vxor.u32 %v1822, 2147483648
        %v1825 = vmul.f32 %v1823, 1.442695
        %v1826 = vpow.pop %v1825
        %v1827 = vmul.f32 %v1824, 1.442695
        %v1828 = vpow.pop %v1827
        %v1829 = vadd.f32 %v1826, 1.0
        %v1830 = vadd.f32 %v1828, 1.0
        %v1831 = vrcp.pop %v1829
        %v1832 = vmul.f32 %v1829, %v1831
        %v1833 = vsub.f32 1.0, %v1832
        %v1834 = vmul.f32 %v1831, %v1833
        %v1835 = vadd.f32 %v1831, %v1834
        %vm1836 = vweird.f32 %v1829
        %vm1837 = vweird.f32 %v1831
        %vm1838 = vmor %vm1836, %vm1837
        %v1839 = vsel %vm1838, %v1831, %v1835
        %v1840 = vand.u32 2147483647, %v1829
        %vm1841 = vcmp.eq.f32.partialorder %v1840, 8.507059e+37
        %v1842 = vand.u32 %v1829, 2147483648
        %v1843 = vor.u32 1.1754944e-38, %v1842
        %v1844 = vsel %vm1841, %v1843, %v1839
        %v1845 = vmul.f32 1.0, %v1844
        %v1846 = vrcp.pop %v1830
        %v1847 = vmul.f32 %v1830, %v1846
        %v1848 = vsub.f32 1.0, %v1847
        %v1849 = vmul.f32 %v1846, %v1848
        %v1850 = vadd.f32 %v1846, %v1849
        %vm1851 = vweird.f32 %v1830
        %vm1852 = vweird.f32 %v1846
        %vm1853 = vmor %vm1851, %vm1852
        %v1854 = vsel %vm1853, %v1846, %v1850
        %v1855 = vand.u32 2147483647, %v1830
        %vm1856 = vcmp.eq.f32.partialorder %v1855, 8.507059e+37
        %v1857 = vand.u32 %v1830, 2147483648
        %v1858 = vor.u32 1.1754944e-38, %v1857
        %v1859 = vsel %vm1856, %v1858, %v1854
        %v1860 = vmul.f32 1.0, %v1859
        %v1861 = vmul.f32 %v1845, 2.0
        %v1862 = vmul.f32 %v1860, 2.0
        %v1863 = vsub.f32 %v1861, 1.0
        %v1864 = vsub.f32 %v1862, 1.0
        %v1865 = vsel %vm656, %v1863, %v1845
        %v1866 = vsel %vm657, %v1864, %v1860
        %v1867 = vmul.f32 %v1865, %v1624
        %v1868 = vmul.f32 %v1865, %v1866
        %1870 = vrot.lane.b32.xlu0 %v1868, 64
        %v1871 = vpop.permute.xlu0 %1870
        %v1873 = vadd.f32 %v1867, %v1871
        %v1874 = vtanh.pop %v1873
        %v1875 = vmul.f32 %v1866, %v1874
        %v1876 = vpack.c.bf16 %v1875, %v1875
        %1878 = vrot.lane.b32.xlu0 %v1876, 64
        %v1879 = vpop.permute.xlu0 %1878
        %v1881 = vsel %vm786, %v1879, 0
        %1883 = vmatpush.bf16.msra.mxu0 0
        %1884 = vmatpush.bf16.msra.mxu0 0
        %1885 = vmatpush.bf16.msra.mxu0 0
        %1886 = vmatpush.bf16.msra.mxu0 0
        %1887 = vmatpush.bf16.msra.mxu0 %v1107
        %1888 = vmatpush.bf16.msra.mxu0 %v1106
        %1889 = vmatpush.bf16.msra.mxu0 %v1105
        %1890 = vmatpush.bf16.msra.mxu0 %v1104
        %1891 = vmatmul.bf16.gmra.mxu0 %v1881
        %v1892 = vpop.f32.mrf.mxu0
        %v1893 = vadd.f32 %v643, %v1892
        %v1894 = vpop.f32.mrf.mxu0
        %1895 = vdwg.mxu0
        %1896 = vmatpush.bf16.msra.mxu0 0
        %1897 = vmatpush.bf16.msra.mxu0 0
        %1898 = vmatpush.bf16.msra.mxu0 0
        %1899 = vmatpush.bf16.msra.mxu0 0
        %1900 = vmatpush.bf16.msra.mxu0 %v1147
        %1901 = vmatpush.bf16.msra.mxu0 %v1146
        %1902 = vmatpush.bf16.msra.mxu0 %v1145
        %1903 = vmatpush.bf16.msra.mxu0 %v1144
        %1904 = vmatmul.bf16.gmra.mxu0 %v1881
        %v1905 = vpop.f32.mrf.mxu0
        %v1906 = vadd.f32 %v647, %v1905
        %v1907 = vpop.f32.mrf.mxu0
        %1908 = vdwg.mxu0
        %v1909 = vsub.f32 %v1893, %v1906
        %v1910 = vmin.f32 %v1909, 0.0
        %v1911 = vand.u32 2147483647, %v1909
        %v1912 = vsub.f32 0.0, %v1911
        %v1913 = vmul.f32 %v1912, 1.442695
        %v1914 = vpow.pop %v1913
        %v1915 = vadd.f32 %v1914, 1.0
        %v1916 = vlog2.pop %v1915
        %v1917 = vmul.f32 %v1916, 0.6931472
        %v1918 = vsub.f32 %v1910, %v1917
        %s1919 = scalar_lea.vmem %s550, 6 [#allocation18]
        %1920 = vst [vmem:[%s1919] sm:$0x3] %v1918
        %1922 = vrot.lane.b32.xlu0 %v1784, 64
        %v1923 = vpop.permute.xlu0 %1922
        %vm1925 = vcmask 517120
        %1926 = vst.msk [vmem:[#allocation2] sm:$0x3] %vm1925, %v1923
        %1928 = vrot.lane.b32.xlu0 %v1782, 64
        %v1929 = vpop.permute.xlu0 %1928
        %1931 = vst.msk [vmem:[#allocation3] sm:$0x3] %vm1925, %v1929
        %1933 = vrot.lane.b32.xlu0 %v1875, 64
        %v1934 = vpop.permute.xlu0 %1933
        %1936 = vst.msk [vmem:[#allocation4] sm:$0x3] %vm1925, %v1934
        %1938 = vrot.lane.b32.xlu0 %v1873, 64
        %v1939 = vpop.permute.xlu0 %1938
        %1941 = vst.msk [vmem:[#allocation5] sm:$0x3] %vm1925, %v1939
        %p1942 = scmp.eq.s32.totalorder %s35, 1
        // Predicated region
        $region97: #{tpu_custom_call.1} parent=63 // pred_check
          %p1943 = pneg %p1942
        $region98: #{tpu_custom_call.1} parent=63 // pred_check_branch
          %1945 = sbr.rel (%p1943) target = $region100
        $region99: #{tpu_custom_call.1} parent=63 // pred_region
          %1946 = vst.msk [vmem:[#allocation19] sm:$0x3] %vm1925, %v1923
          %s1947 = scalar_lea.vmem [#allocation19], 2
          %1948 = vst.msk [vmem:[%s1947] sm:$0x3] %vm1925, %v1934
          %1949 = vst.msk [vmem:[#allocation21] sm:$0x3] %vm1925, %v1929
          %s1950 = scalar_lea.vmem [#allocation21], 2
          %1951 = vst.msk [vmem:[%s1950] sm:$0x3] %vm1925, %v1939
        $region100: #{tpu_custom_call.1} parent=63 // pred_fallthru
          _
        %s1952 = sand.u32 %s279, 1
        %s1953 = scalar_lea.sflag [#allocation8], %s1952
        %s1954 = sand.u32 %s279, 1
        %s1955 = smul.addr %s1954, 8
        %s1956 = scalar_lea.vmem [#allocation18], %s1955
        // Predicated region
        $region101: #{tpu_custom_call.1} parent=63 // pred_check
          %p1957 = pneg %p289
        $region102: #{tpu_custom_call.1} parent=63 // pred_check_branch
          %1959 = sbr.rel (%p1957) target = $region104
        $region103: #{tpu_custom_call.1} parent=63 // pred_region
          %s1960 = smul.u32 4, %s35
          %1962 = vsyncadd %s1953, 0
          %s1963 = smul.addr %s1960, 2
          %s1964 = scalar_lea.hbm %s11, %s1963
          %s1965 = sshll.u32 %s1956, 4
          %s1966 = int_to_ptr.vmem [resolvable:$true] %s1965
          %s1967 = sshll.u32 %s1964, 4
          %s1968 = int_to_ptr.hbm [resolvable:$true] %s1967
          %1973 = dma.vmem_to_hbm [thread:$0]  %s1966, 128, %s1968, %s1953, 32, 32, 2
        $region104: #{tpu_custom_call.1} parent=63 // pred_fallthru
          _
        // Predicated region
        $region105: #{tpu_custom_call.1} parent=63 // pred_check
          %p1974 = pneg %p310
        $region106: #{tpu_custom_call.1} parent=63 // pred_check_branch
          %1976 = sbr.rel (%p1974) target = $region108
        $region107: #{tpu_custom_call.1} parent=63 // pred_region
          %1978 = vsyncadd [#allocation20], 0
          %s1979 = sshll.u32 [#allocation19], 4
          %s1980 = int_to_ptr.vmem [resolvable:$true] %s1979
          %s1981 = sshll.u32 %s12, 4
          %s1982 = int_to_ptr.hbm [resolvable:$true] %s1981
          %1987 = dma.vmem_to_hbm [thread:$0]  %s1980, 64, %s1982, [#allocation20], 32, 32, 2
        $region108: #{tpu_custom_call.1} parent=63 // pred_fallthru
          _
        // Predicated region
        $region109: #{tpu_custom_call.1} parent=63 // pred_check
          %p1988 = pneg %p331
        $region110: #{tpu_custom_call.1} parent=63 // pred_check_branch
          %1990 = sbr.rel (%p1988) target = $region112
        $region111: #{tpu_custom_call.1} parent=63 // pred_region
          %1992 = vsyncadd [#allocation20], 0
          %s1993 = sshll.u32 [#allocation21], 4
          %s1994 = int_to_ptr.vmem [resolvable:$true] %s1993
          %s1995 = sshll.u32 %s13, 4
          %s1996 = int_to_ptr.hbm [resolvable:$true] %s1995
          %2001 = dma.vmem_to_hbm [thread:$0]  %s1994, 64, %s1996, [#allocation20], 32, 32, 2
        $region112: #{tpu_custom_call.1} parent=63 // pred_fallthru
          _
        // Predicated region
        $region113: #{tpu_custom_call.1} parent=63 // pred_check
          %p2002 = pneg %p310
        $region114: #{tpu_custom_call.1} parent=63 // pred_check_branch
          %2004 = sbr.rel (%p2002) target = $region116
        $region115: #{tpu_custom_call.1} parent=63 // pred_region
          %2006 = dma.done [#allocation20], 64
        $region116: #{tpu_custom_call.1} parent=63 // pred_fallthru
          _
        // Predicated region
        $region117: #{tpu_custom_call.1} parent=63 // pred_check
          %p2007 = pneg %p331
        $region118: #{tpu_custom_call.1} parent=63 // pred_check_branch
          %2009 = sbr.rel (%p2007) target = $region120
        $region119: #{tpu_custom_call.1} parent=63 // pred_region
          %2011 = dma.done [#allocation20], 64
        $region120: #{tpu_custom_call.1} parent=63 // pred_fallthru
          _
      $region64: #{tpu_custom_call.1} parent=5 // pred_fallthru
        _
      %p2012 = scmp.le.s32.totalorder 2, %s30
      // Predicated region
      $region121: #{tpu_custom_call.1} parent=5 // pred_check
        %p2013 = pneg %p2012
      $region122: #{tpu_custom_call.1} parent=5 // pred_check_branch
        %2015 = sbr.rel (%p2013) target = $region124
      $region123: #{tpu_custom_call.1} parent=5 // pred_region
        %s2016 = ssub.s32 %s30, 2
        // Predicated region
        $region125: #{tpu_custom_call.1} parent=123 // pred_check
          %p2017 = pneg %p295
        $region126: #{tpu_custom_call.1} parent=123 // pred_check_branch
          %2019 = sbr.rel (%p2017) target = $region128
        $region127: #{tpu_custom_call.1} parent=123 // pred_region
          %s2020 = sand.u32 %s280, 1
          %s2021 = scalar_lea.sflag [#allocation8], %s2020
          %s2022 = sand.u32 %s280, 1
          %s2023 = smul.addr %s2022, 8
          %s2024 = scalar_lea.vmem [#allocation18], %s2023
          %2026 = dma.done %s2021, 128
        $region128: #{tpu_custom_call.1} parent=123 // pred_fallthru
          _
      $region124: #{tpu_custom_call.1} parent=5 // pred_fallthru
        _
    $region6: #{tpu_custom_call.1} parent=1 // loop_footer
      %s34 = sadd.s32 1, %s30
    $region7: #{tpu_custom_call.1} parent=1 // loop_footer_branch
      %29 = sbr.rel target = $region3
    $region8: #{tpu_custom_call.1} parent=1 // loop_exit
      _
    %2027 = vsyncpa [#allocation7], 1
    %s2028 = scalar_lea.sflag [#allocation7], 1
    %2029 = vsyncpa %s2028, 1
    %2030 = vsyncpa [#allocation10], 1
    %2031 = vsyncpa [#allocation13], 1
    %2032 = vsyncpa [#allocation16], 1
    %2033 = vsyncpa [#allocation8], 1
    %s2034 = scalar_lea.sflag [#allocation8], 1
    %2035 = vsyncpa %s2034, 1
    %2036 = vsyncpa [#allocation20], 1

</llo_original>
